<compile_context>
chip_gen: v6e
topology: v6e:2x2x1
jax: 0.10.0
libtpu: 0.0.40
codegen_flags: <defaults>
</compile_context>

<pallas_src>
import functools

import jax
import jax.numpy as jnp
from jax import lax
from jax.experimental import pallas as pl
from jax.experimental.pallas import tpu as pltpu


def _round_up(x, m):
    return ((x + m - 1) // m) * m


def _make_kernel(W, Cin, Cout, marg, NpI, NpO, L1, Lx, mxu_dtype):
    Wp2 = W + 2
    # flattened lane offset of each 3x3 tap (tap k = ky*3 + kx); k=4 is centre.
    offs = [(ky - 1) * Wp2 + (kx - 1) for ky in range(3) for kx in range(3)]

    def kernel(x_ref, wstk_ref, bnb_ref, pa_ref, bres_ref,
               wback_ref, bback_ref, out_ref, xs_ref, taps_ref):
        # ---- extended input window in VMEM (outer margins handled in-kernel).
        # Margins are re-zeroed every step (cheap), which keeps the kernel
        # valid when the "parallel" grid axis is split across TensorCores
        # (a zero-once-at-g==0 guard would not fire on the second core).
        xs_ref[:, 0:2 * marg] = jnp.zeros((Cin, 2 * marg), xs_ref.dtype)
        xs_ref[:, 2 * marg + NpI:Lx] = jnp.zeros(
            (Cin, Lx - 2 * marg - NpI), xs_ref.dtype)
        xs_ref[:, 2 * marg:2 * marg + NpI] = x_ref[...].astype(xs_ref.dtype)

        wstk = wstk_ref[...]          # (2*Cout, 9*Cin): [conv*bn_scale ; wres@centre]
        bn_b = bnb_ref[...]           # (Cout, 1) folded BN bias
        a = pa_ref[...]               # (Cout, 1) per-channel PReLU slope
        bres = bres_ref[...]          # (Cout, 1) res_conv bias
        wback = wback_ref[...]        # (Cin, Cout) res_back_conv weight
        bback = bback_ref[...]        # (Cin, 1)   res_back_conv bias

        def stack_taps(tap_of, width):
            # im2col: rows [k*Cin, (k+1)*Cin) of taps_ref <- source shifted by
            # tap k.  Centre tap (k=4) is the un-shifted identity, which is
            # where the wrapper stacked wres.
            for k in range(9):
                lo = marg + offs[k]
                taps_ref[k * Cin:(k + 1) * Cin, 0:width] = tap_of(lo, width)

        def fused_stage(width):
            # ONE MXU matmul for the 3x3 conv (+BN scale) AND the 1x1 res conv.
            z = jnp.dot(wstk, taps_ref[:, 0:width],
                        preferred_element_type=jnp.float32)   # (2*Cout, width)
            y = z[:Cout, :] + bn_b
            y = jnp.where(y >= 0.0, y, a * y)                  # PReLU
            res = z[Cout:, :] + bres                            # 1x1 res conv
            return y, res

        # ---- stage 1: f1 = relu(conv_bn_prelu(x) + res_conv(identity)) -----
        stack_taps(lambda lo, w: xs_ref[:, lo:lo + w], L1)
        y1, res1 = fused_stage(L1)
        f1 = jnp.maximum(y1 + res1, 0.0)                        # (Cout, L1) f32

        # identity on the stage-1 window; zero on all padding/margin columns.
        ident1 = xs_ref[:, marg:marg + L1].astype(jnp.float32)  # (Cin, L1)

        # ---- f2 = (sigmoid(res_back_conv(f1)) + 1) * identity --------------
        g = jnp.dot(wback, f1.astype(wback.dtype),
                    preferred_element_type=jnp.float32)         # (Cin, L1)
        f2 = (jax.nn.sigmoid(g + bback) + 1.0) * ident1
        f2m = f2.astype(mxu_dtype)

        # ---- stage 2: out = relu(res_conv(f2) + conv_bn_prelu(f2)) ---------
        stack_taps(lambda lo, w: f2m[:, lo:lo + w], NpO)
        y2, res2 = fused_stage(NpO)
        out_ref[...] = jnp.maximum(y2 + res2, 0.0)

    return kernel


def _device_kind():
    try:
        return jax.devices()[0].device_kind.lower()
    except Exception:
        return ""


def _pick_block_b(B, Np, Cin, Cout, kind):
    """VMEM- and generation-aware images-per-grid-step selection."""
    if Np >= 1024:
        # Per-image lane axis already dense; bt=1 removes the wrapper-side
        # batch-interleave transposes entirely.
        return 1
    single_tc = ("v5" in kind) or ("v6" in kind)        # 1 TensorCore per chip
    budget = (48 << 20) if single_tc else (20 << 20)     # conservative on v7x/unknown
    per_img = Np * 4 * (14 * Cin + 7 * Cout)             # rough per-image VMEM bytes
    bt_max = max(1, budget // max(per_img, 1))
    bt = 1
    for d in range(1, B + 1):
        if B % d == 0 and d <= bt_max:
            bt = d
    # On dual-TC chips keep >=2 grid steps so the "parallel" axis engages both
    # TensorCores; on single-TC chips the largest fitting bt wins (fewer steps).
    if (not single_tc) and bt == B and B >= 2 and B % 2 == 0:
        bt = B // 2
    return bt


def rrconv_pallas(x_nchw, params, *, block_b=None, mxu_dtype=jnp.bfloat16):
    B, Cin, H, W = x_nchw.shape
    w3_pt = params["w3_pt"]
    Cout = w3_pt.shape[0]
    Np = (H + 2) * (W + 2)                   # flattened padded spatial per image
    kind = _device_kind()
    bt = _pick_block_b(B, Np, Cin, Cout, kind) if block_b is None else block_b
    assert B % bt == 0
    G = B // bt

    marg = _round_up(W + 3, 8)               # 3x3 tap reach in flattened coords
    NpI = bt * Np                            # data columns per grid step
    NpO = _round_up(NpI, 128)                # lane-dense output width
    L1 = _round_up(NpO + 2 * marg, 128)      # lane-dense stage-1 compute width
    Lx = L1 + 2 * marg                       # extended in-kernel input width

    # ---- fold BatchNorm (eval-mode running stats; module eps=0.001) --------
    eps = 1e-3
    bn_scale = params["bn_gamma"] / jnp.sqrt(params["bn_var"] + eps)
    bn_bias = params["bn_beta"] - params["bn_mean"] * bn_scale

    # ---- pre-stack weights: one (2*Cout, 9*Cin) matrix shared by both stages
    w3s = w3_pt * bn_scale[:, None, None, None]                   # (Cout,Cin,3,3)
    w_taps = jnp.transpose(w3s, (2, 3, 0, 1)).reshape(9, Cout, Cin)
    w_conv = jnp.transpose(w_taps, (1, 0, 2)).reshape(Cout, 9 * Cin)
    wres = params["wres_pt"][:, :, 0, 0]                          # (Cout, Cin)
    w_res = jnp.zeros((Cout, 9 * Cin), jnp.float32)
    w_res = w_res.at[:, 4 * Cin:5 * Cin].set(wres)                # centre tap
    wstk = jnp.concatenate([w_conv, w_res], axis=0).astype(mxu_dtype)
    wback = params["wback_pt"][:, :, 0, 0].astype(mxu_dtype)      # (Cin, Cout)

    # ---- glue: NCHW -> per-image zero ring -> flatten -> bt images on lanes --
    x = x_nchw.astype(jnp.float32)
    xp = jnp.pad(x, ((0, 0), (0, 0), (1, 1), (1, 1)))             # (B,Cin,H+2,W+2)
    xf = xp.reshape(B, Cin, Np)
    if bt > 1:
        xg = jnp.transpose(xf.reshape(G, bt, Cin, Np),
                           (0, 2, 1, 3)).reshape(G, Cin, NpI)
    else:
        xg = xf                                                   # (G, Cin, NpI)

    kernel = _make_kernel(W, Cin, Cout, marg, NpI, NpO, L1, Lx, mxu_dtype)

    # ---- VMEM sizing / compiler params --------------------------------------
    itm = jnp.dtype(mxu_dtype).itemsize
    est_vmem = (4 * 2 * (Cin * NpI + Cout * NpO)          # double-buffered in/out
                + itm * (Cin * Lx + 9 * Cin * L1)         # xs + im2col scratch
                + 4 * (3 * Cout * L1 + 2 * Cin * L1 + 2 * Cout * NpO))
    cap = (120 << 20) if (("v5" in kind) or ("v6" in kind)) else (56 << 20)
    vmem_limit = int(min(cap, max(32 << 20, 2 * est_vmem)))

    flops = 2 * G * (2 * Cout * 9 * Cin * (L1 + NpO) + Cin * Cout * L1)
    bytes_accessed = (4 * G * (Cin * NpI + Cout * NpO)
                      + 4 * (2 * Cout * 9 * Cin + Cin * Cout + 3 * Cout + Cin))
    cost = pl.CostEstimate(flops=flops, transcendentals=G * Cin * L1,
                           bytes_accessed=bytes_accessed)

    out = pl.pallas_call(
        kernel,
        out_shape=jax.ShapeDtypeStruct((G, Cout, NpO), jnp.float32),
        grid_spec=pltpu.PrefetchScalarGridSpec(
            num_scalar_prefetch=0,
            grid=(G,),
            in_specs=[
                pl.BlockSpec((None, Cin, NpI), lambda g: (g, 0, 0)),  # x block
                pl.BlockSpec((2 * Cout, 9 * Cin), lambda g: (0, 0)),  # stacked w
                pl.BlockSpec((Cout, 1), lambda g: (0, 0)),            # bn bias
                pl.BlockSpec((Cout, 1), lambda g: (0, 0)),            # prelu a
                pl.BlockSpec((Cout, 1), lambda g: (0, 0)),            # res bias
                pl.BlockSpec((Cin, Cout), lambda g: (0, 0)),          # back w
                pl.BlockSpec((Cin, 1), lambda g: (0, 0)),             # back bias
            ],
            out_specs=pl.BlockSpec((None, Cout, NpO), lambda g: (g, 0, 0)),
            scratch_shapes=[
                pltpu.VMEM((Cin, Lx), mxu_dtype),       # extended input window
                pltpu.VMEM((9 * Cin, L1), mxu_dtype),   # stacked im2col taps
            ],
        ),
        compiler_params=pltpu.CompilerParams(
            dimension_semantics=("parallel",),
            vmem_limit_bytes=vmem_limit),
        cost_estimate=cost,
    )(xg, wstk, bn_bias.reshape(Cout, 1), params["prelu_a"].reshape(Cout, 1),
      params["bres"].reshape(Cout, 1), wback, params["bback"].reshape(Cin, 1))

    # ---- glue: strip lane rounding, peel images apart, drop the padded ring -
    out = out[:, :, :NpI]
    if bt > 1:
        out = jnp.transpose(out.reshape(G, Cout, bt, Np), (0, 2, 1, 3))
    out = out.reshape(B, Cout, H + 2, W + 2)
    return out[:, :, 1:H + 1, 1:W + 1]


def init_params(key, Cin, Cout):
    ks = jax.random.split(key, 9)
    return dict(
        w3_pt=jax.random.normal(ks[0], (Cout, Cin, 3, 3), jnp.float32) * 0.2,
        bn_gamma=jax.random.uniform(ks[1], (Cout,), jnp.float32, 0.5, 1.5),
        bn_beta=jax.random.normal(ks[2], (Cout,), jnp.float32) * 0.1,
        bn_mean=jax.random.normal(ks[3], (Cout,), jnp.float32) * 0.1,
        bn_var=jax.random.uniform(ks[4], (Cout,), jnp.float32, 0.5, 1.5),
        # nn.PReLU(nIn) in BNPReLU -> per-channel slopes (nIn = Cout here).
        prelu_a=jnp.full((Cout,), 0.25, jnp.float32),
        wres_pt=jax.random.normal(ks[5], (Cout, Cin, 1, 1), jnp.float32) * 0.2,
        bres=jax.random.normal(ks[6], (Cout,), jnp.float32) * 0.1,
        wback_pt=jax.random.normal(ks[7], (Cin, Cout, 1, 1), jnp.float32) * 0.2,
        bback=jax.random.normal(ks[8], (Cin,), jnp.float32) * 0.1,
    )


def ref_forward(x, p):
    """Pure-JAX reference of RrConv.forward (eval-mode BN, eps=0.001)."""
    eps = 1e-3
    bn_scale = p["bn_gamma"] / jnp.sqrt(p["bn_var"] + eps)
    bn_bias = p["bn_beta"] - p["bn_mean"] * bn_scale

    def conv3(inp):
        y = lax.conv_general_dilated(inp, p["w3_pt"], (1, 1), ((1, 1), (1, 1)),
                                     dimension_numbers=("NCHW", "OIHW", "NCHW"))
        y = y * bn_scale.reshape(1, -1, 1, 1) + bn_bias.reshape(1, -1, 1, 1)
        a = p["prelu_a"].reshape(1, -1, 1, 1)
        return jnp.where(y >= 0.0, y, a * y)

    def conv1(inp, w, b):
        y = lax.conv_general_dilated(inp, w, (1, 1), ((0, 0), (0, 0)),
                                     dimension_numbers=("NCHW", "OIHW", "NCHW"))
        return y + b.reshape(1, -1, 1, 1)

    identity = x
    y = conv3(x)
    f1 = jnp.maximum(y + conv1(identity, p["wres_pt"], p["bres"]), 0.0)
    f2 = (jax.nn.sigmoid(conv1(f1, p["wback_pt"], p["bback"])) + 1.0) * identity
    y = conv3(f2)
    return jnp.maximum(conv1(f2, p["wres_pt"], p["bres"]) + y, 0.0)


if __name__ == "__main__":
    key = jax.random.PRNGKey(0)
    B, Cin, Cout, H, W = 4, 4, 8, 16, 16
    kx_, kp_ = jax.random.split(key)
    x = jax.random.normal(kx_, (B, Cin, H, W), jnp.float32)
    params = init_params(kp_, Cin, Cout)

    ref = jax.block_until_ready(ref_forward(x, params))

    # authoritative exactness check: f32 MXU path
    out_f32 = jax.block_until_ready(
        jax.jit(functools.partial(rrconv_pallas, mxu_dtype=jnp.float32))(x, params))
    # production path per perf review: bf16 MXU inputs, f32 accumulation
    out_bf16 = jax.block_until_ready(
        jax.jit(functools.partial(rrconv_pallas, mxu_dtype=jnp.bfloat16))(x, params))

    assert out_f32.shape == (B, Cout, H, W), out_f32.shape
    err32 = float(jnp.max(jnp.abs(out_f32 - ref)))
    scale = max(1.0, float(jnp.max(jnp.abs(ref))))
    err16 = float(jnp.max(jnp.abs(out_bf16 - ref)))
    if err32 < 2e-3 and err16 < 5e-2 * scale:
        print("KERNEL_OK")
    else:
        print("MISMATCH", err32, err16)
</pallas_src>

<mosaic_0001>
module attributes {stable_mosaic.version = 11 : i64} {
  func.func @kernel(%arg0: i32, %arg1: memref<1x4x648xf32, #tpu.memory_space<vmem>>, %arg2: memref<16x36xf32, #tpu.memory_space<vmem>>, %arg3: memref<8x1xf32, #tpu.memory_space<vmem>>, %arg4: memref<8x1xf32, #tpu.memory_space<vmem>>, %arg5: memref<8x1xf32, #tpu.memory_space<vmem>>, %arg6: memref<4x8xf32, #tpu.memory_space<vmem>>, %arg7: memref<4x1xf32, #tpu.memory_space<vmem>>, %arg8: memref<1x8x768xf32, #tpu.memory_space<vmem>>, %arg9: memref<4x944xf32, #tpu.memory_space<vmem>>, %arg10: memref<36x896xf32, #tpu.memory_space<vmem>>) attributes {dimension_semantics = [#tpu.dimension_semantics<parallel>], iteration_bounds = array<i64: 2>, scalar_prefetch = 0 : i64, scratch_operands = 2 : i64, tpu.core_type = #tpu.core_type<tc>, window_params = [{transform_indices = @transform_0, window_bounds = array<i64: 1, 4, 648>}, {pipeline_mode = #tpu.pipeline_mode<synchronous>, transform_indices = @transform_1, window_bounds = array<i64: 16, 36>}, {pipeline_mode = #tpu.pipeline_mode<synchronous>, transform_indices = @transform_2, window_bounds = array<i64: 8, 1>}, {pipeline_mode = #tpu.pipeline_mode<synchronous>, transform_indices = @transform_3, window_bounds = array<i64: 8, 1>}, {pipeline_mode = #tpu.pipeline_mode<synchronous>, transform_indices = @transform_4, window_bounds = array<i64: 8, 1>}, {pipeline_mode = #tpu.pipeline_mode<synchronous>, transform_indices = @transform_5, window_bounds = array<i64: 4, 8>}, {pipeline_mode = #tpu.pipeline_mode<synchronous>, transform_indices = @transform_6, window_bounds = array<i64: 4, 1>}, {transform_indices = @transform_7, window_bounds = array<i64: 1, 8, 768>}]} {
    %cst = arith.constant 0.000000e+00 : f32
    %0 = vector.broadcast %cst : f32 to vector<4x48xf32>
    %c0 = arith.constant 0 : index
    %c0_0 = arith.constant 0 : index
    %1 = vector.load %arg9[%c0, %c0_0] : memref<4x944xf32, #tpu.memory_space<vmem>>, vector<4x48xf32>
    tpu.vector_store %arg9[%c0, %c0_0], %0 {strides = array<i32>} : memref<4x944xf32, #tpu.memory_space<vmem>>, vector<4x48xf32>,
    %cst_1 = arith.constant 0.000000e+00 : f32
    %2 = vector.broadcast %cst_1 : f32 to vector<4x248xf32>
    %c0_2 = arith.constant 0 : index
    %c696 = arith.constant 696 : index
    %3 = vector.load %arg9[%c0_2, %c696] : memref<4x944xf32, #tpu.memory_space<vmem>>, vector<4x248xf32>
    tpu.vector_store %arg9[%c0_2, %c696], %2 {strides = array<i32>} : memref<4x944xf32, #tpu.memory_space<vmem>>, vector<4x248xf32>,
    %c0_3 = arith.constant 0 : index
    %c0_4 = arith.constant 0 : index
    %c0_5 = arith.constant 0 : index
    %4 = vector.load %arg1[%c0_3, %c0_4, %c0_5] : memref<1x4x648xf32, #tpu.memory_space<vmem>>, vector<1x4x648xf32>
    %5 = vector.shape_cast %4 : vector<1x4x648xf32> to vector<4x648xf32>
    %c0_6 = arith.constant 0 : index
    %c48 = arith.constant 48 : index
    %6 = vector.load %arg9[%c0_6, %c48] : memref<4x944xf32, #tpu.memory_space<vmem>>, vector<4x648xf32>
    tpu.vector_store %arg9[%c0_6, %c48], %5 {strides = array<i32>} : memref<4x944xf32, #tpu.memory_space<vmem>>, vector<4x648xf32>,
    %c0_7 = arith.constant 0 : index
    %c0_8 = arith.constant 0 : index
    %7 = vector.load %arg2[%c0_7, %c0_8] : memref<16x36xf32, #tpu.memory_space<vmem>>, vector<16x36xf32>
    %c0_9 = arith.constant 0 : index
    %c0_10 = arith.constant 0 : index
    %8 = vector.load %arg3[%c0_9, %c0_10] : memref<8x1xf32, #tpu.memory_space<vmem>>, vector<8x1xf32>
    %c0_11 = arith.constant 0 : index
    %c0_12 = arith.constant 0 : index
    %9 = vector.load %arg4[%c0_11, %c0_12] : memref<8x1xf32, #tpu.memory_space<vmem>>, vector<8x1xf32>
    %c0_13 = arith.constant 0 : index
    %c0_14 = arith.constant 0 : index
    %10 = vector.load %arg5[%c0_13, %c0_14] : memref<8x1xf32, #tpu.memory_space<vmem>>, vector<8x1xf32>
    %c0_15 = arith.constant 0 : index
    %c0_16 = arith.constant 0 : index
    %11 = vector.load %arg6[%c0_15, %c0_16] : memref<4x8xf32, #tpu.memory_space<vmem>>, vector<4x8xf32>
    %c0_17 = arith.constant 0 : index
    %c0_18 = arith.constant 0 : index
    %12 = vector.load %arg7[%c0_17, %c0_18] : memref<4x1xf32, #tpu.memory_space<vmem>>, vector<4x1xf32>
    %c0_19 = arith.constant 0 : index
    %c5 = arith.constant 5 : index
    %13 = vector.load %arg9[%c0_19, %c5] : memref<4x944xf32, #tpu.memory_space<vmem>>, vector<4x896xf32>
    %c0_20 = arith.constant 0 : index
    %c0_21 = arith.constant 0 : index
    %14 = vector.load %arg10[%c0_20, %c0_21] : memref<36x896xf32, #tpu.memory_space<vmem>>, vector<4x896xf32>
    tpu.vector_store %arg10[%c0_20, %c0_21], %13 {strides = array<i32>} : memref<36x896xf32, #tpu.memory_space<vmem>>, vector<4x896xf32>,
    %c0_22 = arith.constant 0 : index
    %c6 = arith.constant 6 : index
    %15 = vector.load %arg9[%c0_22, %c6] : memref<4x944xf32, #tpu.memory_space<vmem>>, vector<4x896xf32>
    %c4 = arith.constant 4 : index
    %c0_23 = arith.constant 0 : index
    %16 = vector.load %arg10[%c4, %c0_23] : memref<36x896xf32, #tpu.memory_space<vmem>>, vector<4x896xf32>
    tpu.vector_store %arg10[%c4, %c0_23], %15 {strides = array<i32>} : memref<36x896xf32, #tpu.memory_space<vmem>>, vector<4x896xf32>,
    %c0_24 = arith.constant 0 : index
    %c7 = arith.constant 7 : index
    %17 = vector.load %arg9[%c0_24, %c7] : memref<4x944xf32, #tpu.memory_space<vmem>>, vector<4x896xf32>
    %c8 = arith.constant 8 : index
    %c0_25 = arith.constant 0 : index
    %18 = vector.load %arg10[%c8, %c0_25] : memref<36x896xf32, #tpu.memory_space<vmem>>, vector<4x896xf32>
    tpu.vector_store %arg10[%c8, %c0_25], %17 {strides = array<i32>} : memref<36x896xf32, #tpu.memory_space<vmem>>, vector<4x896xf32>,
    %c0_26 = arith.constant 0 : index
    %c23 = arith.constant 23 : index
    %19 = vector.load %arg9[%c0_26, %c23] : memref<4x944xf32, #tpu.memory_space<vmem>>, vector<4x896xf32>
    %c12 = arith.constant 12 : index
    %c0_27 = arith.constant 0 : index
    %20 = vector.load %arg10[%c12, %c0_27] : memref<36x896xf32, #tpu.memory_space<vmem>>, vector<4x896xf32>
    tpu.vector_store %arg10[%c12, %c0_27], %19 {strides = array<i32>} : memref<36x896xf32, #tpu.memory_space<vmem>>, vector<4x896xf32>,
    %c0_28 = arith.constant 0 : index
    %c24 = arith.constant 24 : index
    %21 = vector.load %arg9[%c0_28, %c24] : memref<4x944xf32, #tpu.memory_space<vmem>>, vector<4x896xf32>
    %c16 = arith.constant 16 : index
    %c0_29 = arith.constant 0 : index
    %22 = vector.load %arg10[%c16, %c0_29] : memref<36x896xf32, #tpu.memory_space<vmem>>, vector<4x896xf32>
    tpu.vector_store %arg10[%c16, %c0_29], %21 {strides = array<i32>} : memref<36x896xf32, #tpu.memory_space<vmem>>, vector<4x896xf32>,
    %c0_30 = arith.constant 0 : index
    %c25 = arith.constant 25 : index
    %23 = vector.load %arg9[%c0_30, %c25] : memref<4x944xf32, #tpu.memory_space<vmem>>, vector<4x896xf32>
    %c20 = arith.constant 20 : index
    %c0_31 = arith.constant 0 : index
    %24 = vector.load %arg10[%c20, %c0_31] : memref<36x896xf32, #tpu.memory_space<vmem>>, vector<4x896xf32>
    tpu.vector_store %arg10[%c20, %c0_31], %23 {strides = array<i32>} : memref<36x896xf32, #tpu.memory_space<vmem>>, vector<4x896xf32>,
    %c0_32 = arith.constant 0 : index
    %c41 = arith.constant 41 : index
    %25 = vector.load %arg9[%c0_32, %c41] : memref<4x944xf32, #tpu.memory_space<vmem>>, vector<4x896xf32>
    %c24_33 = arith.constant 24 : index
    %c0_34 = arith.constant 0 : index
    %26 = vector.load %arg10[%c24_33, %c0_34] : memref<36x896xf32, #tpu.memory_space<vmem>>, vector<4x896xf32>
    tpu.vector_store %arg10[%c24_33, %c0_34], %25 {strides = array<i32>} : memref<36x896xf32, #tpu.memory_space<vmem>>, vector<4x896xf32>,
    %c0_35 = arith.constant 0 : index
    %c42 = arith.constant 42 : index
    %27 = vector.load %arg9[%c0_35, %c42] : memref<4x944xf32, #tpu.memory_space<vmem>>, vector<4x896xf32>
    %c28 = arith.constant 28 : index
    %c0_36 = arith.constant 0 : index
    %28 = vector.load %arg10[%c28, %c0_36] : memref<36x896xf32, #tpu.memory_space<vmem>>, vector<4x896xf32>
    tpu.vector_store %arg10[%c28, %c0_36], %27 {strides = array<i32>} : memref<36x896xf32, #tpu.memory_space<vmem>>, vector<4x896xf32>,
    %c0_37 = arith.constant 0 : index
    %c43 = arith.constant 43 : index
    %29 = vector.load %arg9[%c0_37, %c43] : memref<4x944xf32, #tpu.memory_space<vmem>>, vector<4x896xf32>
    %c32 = arith.constant 32 : index
    %c0_38 = arith.constant 0 : index
    %30 = vector.load %arg10[%c32, %c0_38] : memref<36x896xf32, #tpu.memory_space<vmem>>, vector<4x896xf32>
    tpu.vector_store %arg10[%c32, %c0_38], %29 {strides = array<i32>} : memref<36x896xf32, #tpu.memory_space<vmem>>, vector<4x896xf32>,
    %c0_39 = arith.constant 0 : index
    %c0_40 = arith.constant 0 : index
    %31 = vector.load %arg10[%c0_39, %c0_40] : memref<36x896xf32, #tpu.memory_space<vmem>>, vector<36x896xf32>
    %cst_41 = arith.constant dense<0.000000e+00> : vector<16x896xf32>
    %32 = tpu.matmul %7, %31, %cst_41 {dimension_numbers = #tpu.dot_dimension_numbers<[1], [0], [0], [1], [0, 0, 1, 1], [], []>} : vector<16x36xf32>, vector<36x896xf32>, vector<16x896xf32> -> vector<16x896xf32>
    %33 = vector.extract_strided_slice %32 {offsets = [0, 0], sizes = [8, 896], strides = [1, 1]} : vector<16x896xf32> to vector<8x896xf32>
    %34 = vector.broadcast %8 : vector<8x1xf32> to vector<8x896xf32>
    %35 = arith.addf %33, %34 : vector<8x896xf32>
    %cst_42 = arith.constant 0.000000e+00 : f32
    %36 = vector.broadcast %cst_42 : f32 to vector<8x896xf32>
    %37 = arith.cmpf oge, %35, %36 : vector<8x896xf32>
    %38 = vector.broadcast %9 : vector<8x1xf32> to vector<8x896xf32>
    %39 = arith.mulf %38, %35 : vector<8x896xf32>
    %40 = arith.select %37, %35, %39 : vector<8x896xi1>, vector<8x896xf32>
    %41 = vector.extract_strided_slice %32 {offsets = [8, 0], sizes = [8, 896], strides = [1, 1]} : vector<16x896xf32> to vector<8x896xf32>
    %42 = vector.broadcast %10 : vector<8x1xf32> to vector<8x896xf32>
    %43 = arith.addf %41, %42 : vector<8x896xf32>
    %44 = arith.addf %40, %43 : vector<8x896xf32>
    %cst_43 = arith.constant 0.000000e+00 : f32
    %45 = vector.broadcast %cst_43 : f32 to vector<8x896xf32>
    %46 = arith.maximumf %44, %45 : vector<8x896xf32>
    %c0_44 = arith.constant 0 : index
    %c24_45 = arith.constant 24 : index
    %47 = vector.load %arg9[%c0_44, %c24_45] : memref<4x944xf32, #tpu.memory_space<vmem>>, vector<4x896xf32>
    %cst_46 = arith.constant dense<0.000000e+00> : vector<4x896xf32>
    %48 = tpu.matmul %11, %46, %cst_46 {dimension_numbers = #tpu.dot_dimension_numbers<[1], [0], [0], [1], [0, 0, 1, 1], [], []>} : vector<4x8xf32>, vector<8x896xf32>, vector<4x896xf32> -> vector<4x896xf32>
    %49 = vector.broadcast %12 : vector<4x1xf32> to vector<4x896xf32>
    %50 = arith.addf %48, %49 : vector<4x896xf32>
    %51 = arith.negf %50 : vector<4x896xf32>
    %52 = math.exp %51 : vector<4x896xf32>
    %cst_47 = arith.constant 1.000000e+00 : f32
    %53 = vector.broadcast %cst_47 : f32 to vector<4x896xf32>
    %54 = arith.addf %53, %52 : vector<4x896xf32>
    %55 = arith.divf %53, %54 : vector<4x896xf32>
    %cst_48 = arith.constant 1.000000e+00 : f32
    %56 = vector.broadcast %cst_48 : f32 to vector<4x896xf32>
    %57 = arith.addf %55, %56 : vector<4x896xf32>
    %58 = arith.mulf %57, %47 : vector<4x896xf32>
    %59 = vector.extract_strided_slice %58 {offsets = [0, 5], sizes = [4, 768], strides = [1, 1]} : vector<4x896xf32> to vector<4x768xf32>
    %c0_49 = arith.constant 0 : index
    %c0_50 = arith.constant 0 : index
    %60 = vector.load %arg10[%c0_49, %c0_50] : memref<36x896xf32, #tpu.memory_space<vmem>>, vector<4x768xf32>
    tpu.vector_store %arg10[%c0_49, %c0_50], %59 {strides = array<i32>} : memref<36x896xf32, #tpu.memory_space<vmem>>, vector<4x768xf32>,
    %61 = vector.extract_strided_slice %58 {offsets = [0, 6], sizes = [4, 768], strides = [1, 1]} : vector<4x896xf32> to vector<4x768xf32>
    %c4_51 = arith.constant 4 : index
    %c0_52 = arith.constant 0 : index
    %62 = vector.load %arg10[%c4_51, %c0_52] : memref<36x896xf32, #tpu.memory_space<vmem>>, vector<4x768xf32>
    tpu.vector_store %arg10[%c4_51, %c0_52], %61 {strides = array<i32>} : memref<36x896xf32, #tpu.memory_space<vmem>>, vector<4x768xf32>,
    %63 = vector.extract_strided_slice %58 {offsets = [0, 7], sizes = [4, 768], strides = [1, 1]} : vector<4x896xf32> to vector<4x768xf32>
    %c8_53 = arith.constant 8 : index
    %c0_54 = arith.constant 0 : index
    %64 = vector.load %arg10[%c8_53, %c0_54] : memref<36x896xf32, #tpu.memory_space<vmem>>, vector<4x768xf32>
    tpu.vector_store %arg10[%c8_53, %c0_54], %63 {strides = array<i32>} : memref<36x896xf32, #tpu.memory_space<vmem>>, vector<4x768xf32>,
    %65 = vector.extract_strided_slice %58 {offsets = [0, 23], sizes = [4, 768], strides = [1, 1]} : vector<4x896xf32> to vector<4x768xf32>
    %c12_55 = arith.constant 12 : index
    %c0_56 = arith.constant 0 : index
    %66 = vector.load %arg10[%c12_55, %c0_56] : memref<36x896xf32, #tpu.memory_space<vmem>>, vector<4x768xf32>
    tpu.vector_store %arg10[%c12_55, %c0_56], %65 {strides = array<i32>} : memref<36x896xf32, #tpu.memory_space<vmem>>, vector<4x768xf32>,
    %67 = vector.extract_strided_slice %58 {offsets = [0, 24], sizes = [4, 768], strides = [1, 1]} : vector<4x896xf32> to vector<4x768xf32>
    %c16_57 = arith.constant 16 : index
    %c0_58 = arith.constant 0 : index
    %68 = vector.load %arg10[%c16_57, %c0_58] : memref<36x896xf32, #tpu.memory_space<vmem>>, vector<4x768xf32>
    tpu.vector_store %arg10[%c16_57, %c0_58], %67 {strides = array<i32>} : memref<36x896xf32, #tpu.memory_space<vmem>>, vector<4x768xf32>,
    %69 = vector.extract_strided_slice %58 {offsets = [0, 25], sizes = [4, 768], strides = [1, 1]} : vector<4x896xf32> to vector<4x768xf32>
    %c20_59 = arith.constant 20 : index
    %c0_60 = arith.constant 0 : index
    %70 = vector.load %arg10[%c20_59, %c0_60] : memref<36x896xf32, #tpu.memory_space<vmem>>, vector<4x768xf32>
    tpu.vector_store %arg10[%c20_59, %c0_60], %69 {strides = array<i32>} : memref<36x896xf32, #tpu.memory_space<vmem>>, vector<4x768xf32>,
    %71 = vector.extract_strided_slice %58 {offsets = [0, 41], sizes = [4, 768], strides = [1, 1]} : vector<4x896xf32> to vector<4x768xf32>
    %c24_61 = arith.constant 24 : index
    %c0_62 = arith.constant 0 : index
    %72 = vector.load %arg10[%c24_61, %c0_62] : memref<36x896xf32, #tpu.memory_space<vmem>>, vector<4x768xf32>
    tpu.vector_store %arg10[%c24_61, %c0_62], %71 {strides = array<i32>} : memref<36x896xf32, #tpu.memory_space<vmem>>, vector<4x768xf32>,
    %73 = vector.extract_strided_slice %58 {offsets = [0, 42], sizes = [4, 768], strides = [1, 1]} : vector<4x896xf32> to vector<4x768xf32>
    %c28_63 = arith.constant 28 : index
    %c0_64 = arith.constant 0 : index
    %74 = vector.load %arg10[%c28_63, %c0_64] : memref<36x896xf32, #tpu.memory_space<vmem>>, vector<4x768xf32>
    tpu.vector_store %arg10[%c28_63, %c0_64], %73 {strides = array<i32>} : memref<36x896xf32, #tpu.memory_space<vmem>>, vector<4x768xf32>,
    %75 = vector.extract_strided_slice %58 {offsets = [0, 43], sizes = [4, 768], strides = [1, 1]} : vector<4x896xf32> to vector<4x768xf32>
    %c32_65 = arith.constant 32 : index
    %c0_66 = arith.constant 0 : index
    %76 = vector.load %arg10[%c32_65, %c0_66] : memref<36x896xf32, #tpu.memory_space<vmem>>, vector<4x768xf32>
    tpu.vector_store %arg10[%c32_65, %c0_66], %75 {strides = array<i32>} : memref<36x896xf32, #tpu.memory_space<vmem>>, vector<4x768xf32>,
    %c0_67 = arith.constant 0 : index
    %c0_68 = arith.constant 0 : index
    %77 = vector.load %arg10[%c0_67, %c0_68] : memref<36x896xf32, #tpu.memory_space<vmem>>, vector<36x768xf32>
    %cst_69 = arith.constant dense<0.000000e+00> : vector<16x768xf32>
    %78 = tpu.matmul %7, %77, %cst_69 {dimension_numbers = #tpu.dot_dimension_numbers<[1], [0], [0], [1], [0, 0, 1, 1], [], []>} : vector<16x36xf32>, vector<36x768xf32>, vector<16x768xf32> -> vector<16x768xf32>
    %79 = vector.extract_strided_slice %78 {offsets = [0, 0], sizes = [8, 768], strides = [1, 1]} : vector<16x768xf32> to vector<8x768xf32>
    %80 = vector.broadcast %8 : vector<8x1xf32> to vector<8x768xf32>
    %81 = arith.addf %79, %80 : vector<8x768xf32>
    %cst_70 = arith.constant 0.000000e+00 : f32
    %82 = vector.broadcast %cst_70 : f32 to vector<8x768xf32>
    %83 = arith.cmpf oge, %81, %82 : vector<8x768xf32>
    %84 = vector.broadcast %9 : vector<8x1xf32> to vector<8x768xf32>
    %85 = arith.mulf %84, %81 : vector<8x768xf32>
    %86 = arith.select %83, %81, %85 : vector<8x768xi1>, vector<8x768xf32>
    %87 = vector.extract_strided_slice %78 {offsets = [8, 0], sizes = [8, 768], strides = [1, 1]} : vector<16x768xf32> to vector<8x768xf32>
    %88 = vector.broadcast %10 : vector<8x1xf32> to vector<8x768xf32>
    %89 = arith.addf %87, %88 : vector<8x768xf32>
    %90 = arith.addf %86, %89 : vector<8x768xf32>
    %cst_71 = arith.constant 0.000000e+00 : f32
    %91 = vector.broadcast %cst_71 : f32 to vector<8x768xf32>
    %92 = arith.maximumf %90, %91 : vector<8x768xf32>
    %c0_72 = arith.constant 0 : index
    %c0_73 = arith.constant 0 : index
    %c0_74 = arith.constant 0 : index
    %93 = vector.load %arg8[%c0_72, %c0_73, %c0_74] : memref<1x8x768xf32, #tpu.memory_space<vmem>>, vector<1x8x768xf32>
    %94 = vector.shape_cast %93 : vector<1x8x768xf32> to vector<8x768xf32>
    %95 = vector.shape_cast %92 : vector<8x768xf32> to vector<1x8x768xf32>
    tpu.vector_store %arg8[%c0_72, %c0_73, %c0_74], %95 {strides = array<i32>} : memref<1x8x768xf32, #tpu.memory_space<vmem>>, vector<1x8x768xf32>,
    return
  }
  func.func @transform_0(%arg0: i32) -> (i32, i32, i32) {
    %c0_i32 = arith.constant 0 : i32
    %c0_i32_0 = arith.constant 0 : i32
    %c0_i32_1 = arith.constant 0 : i32
    return %arg0, %c0_i32, %c0_i32_0 : i32, i32, i32
  }
  func.func @transform_1(%arg0: i32) -> (i32, i32) {
    %c0_i32 = arith.constant 0 : i32
    %c0_i32_0 = arith.constant 0 : i32
    %c0_i32_1 = arith.constant 0 : i32
    return %c0_i32, %c0_i32_0 : i32, i32
  }
  func.func @transform_2(%arg0: i32) -> (i32, i32) {
    %c0_i32 = arith.constant 0 : i32
    %c0_i32_0 = arith.constant 0 : i32
    %c0_i32_1 = arith.constant 0 : i32
    return %c0_i32, %c0_i32_0 : i32, i32
  }
  func.func @transform_3(%arg0: i32) -> (i32, i32) {
    %c0_i32 = arith.constant 0 : i32
    %c0_i32_0 = arith.constant 0 : i32
    %c0_i32_1 = arith.constant 0 : i32
    return %c0_i32, %c0_i32_0 : i32, i32
  }
  func.func @transform_4(%arg0: i32) -> (i32, i32) {
    %c0_i32 = arith.constant 0 : i32
    %c0_i32_0 = arith.constant 0 : i32
    %c0_i32_1 = arith.constant 0 : i32
    return %c0_i32, %c0_i32_0 : i32, i32
  }
  func.func @transform_5(%arg0: i32) -> (i32, i32) {
    %c0_i32 = arith.constant 0 : i32
    %c0_i32_0 = arith.constant 0 : i32
    %c0_i32_1 = arith.constant 0 : i32
    return %c0_i32, %c0_i32_0 : i32, i32
  }
  func.func @transform_6(%arg0: i32) -> (i32, i32) {
    %c0_i32 = arith.constant 0 : i32
    %c0_i32_0 = arith.constant 0 : i32
    %c0_i32_1 = arith.constant 0 : i32
    return %c0_i32, %c0_i32_0 : i32, i32
  }
  func.func @transform_7(%arg0: i32) -> (i32, i32, i32) {
    %c0_i32 = arith.constant 0 : i32
    %c0_i32_0 = arith.constant 0 : i32
    %c0_i32_1 = arith.constant 0 : i32
    return %arg0, %c0_i32, %c0_i32_0 : i32, i32, i32
  }
}

</mosaic_0001>

<llo_original>
// kernel: rrconv_pallas.1
$region0: #{rrconv_pallas.1}
  #allocation0 [shape = 'u32[]', space=smem, size = 0x4, offset = 0x4, fixed_abs, tag = 'smem constant byte address 0x4 - core index']
  #allocation1 [shape = 'u32[144,128]{1,0:T(1,128)}', space=vmem, size = 0x12000, scoped, tag = 'internal scratch']
  #allocation2 [shape = 'f32[4,944]{1,0:T(4,128)}', space=vmem, size = 0x4000, scoped, tag = 'scratch operand']
  #allocation3 [shape = 'f32[36,896]{1,0:T(8,128)}', space=vmem, size = 0x23000, scoped, tag = 'scratch operand']
  %s0 = inlined_call_operand.vmem [shape: f32[2,4,648], index: 0, kind: input, shape index: {}]
  %s1 = inlined_call_operand.vmem [shape: f32[16,36], index: 1, kind: input, shape index: {}]
  %s2 = inlined_call_operand.vmem [shape: f32[8,1], index: 2, kind: input, shape index: {}]
  %s3 = inlined_call_operand.vmem [shape: f32[8,1], index: 3, kind: input, shape index: {}]
  %s4 = inlined_call_operand.vmem [shape: f32[8,1], index: 4, kind: input, shape index: {}]
  %s5 = inlined_call_operand.vmem [shape: f32[4,8], index: 5, kind: input, shape index: {}]
  %s6 = inlined_call_operand.vmem [shape: f32[4,1], index: 6, kind: input, shape index: {}]
  %s7 = inlined_call_operand.vmem [shape: f32[2,8,768], index: 7, kind: output, shape index: {}]
  %s8 = sld [smem:[#allocation0]]
  $region61: #{rrconv_pallas.1} parent=0
    _
  %s10 = ssub.s32 1, %s8
  %s11 = scalar_select 0, %s10, %s8
  loop: start=0, step=1, limit=4
  $region2: #{rrconv_pallas.1} parent=0 // loop_pre_header
    _
  $region3: #{rrconv_pallas.1} parent=0 // loop_header
    %s13 = sphi 0, %s17
    %p14 = scmp.ge.s32.totalorder %s13, 4
    %s23 = sphi 0, %s25
    %s26 = sphi 0, %s23
    %s27 = sphi 0, %s26
    %s43 = sphi 0, %s27
    %s47 = sphi 0, %s47
    %s49 = sphi 0, %s47
    %s50 = sphi 0, %s49
    %s64 = sphi 0, %s50
    %s68 = sphi 0, %s68
    %s70 = sphi 0, %s68
    %s71 = sphi 0, %s70
    %s85 = sphi 0, %s71
    %s89 = sphi 0, %s89
    %s91 = sphi 0, %s89
    %s92 = sphi 0, %s91
    %s106 = sphi 0, %s92
    %s110 = sphi 0, %s110
    %s112 = sphi 0, %s110
    %s113 = sphi 0, %s112
    %s127 = sphi 0, %s113
    %s131 = sphi 0, %s131
    %s133 = sphi 0, %s131
    %s134 = sphi 0, %s133
    %s148 = sphi 0, %s134
    %s152 = sphi 0, %s152
    %s154 = sphi 0, %s152
    %s155 = sphi 0, %s154
    %s169 = sphi 0, %s155
    %s175 = sphi 0, %s177
    %s178 = sphi 0, %s175
    %s179 = sphi 0, %s178
    %s195 = sphi 0, %s179
  $region4: #{rrconv_pallas.1} parent=0 // loop_header_branch
    %16 = sbr.rel (%p14) target = $region8
  $region5: #{rrconv_pallas.1} parent=0 // loop_body
    %s18 = ssub.s32 %s13, 1
    %s19 = ssub.s32 %s13, 2
    %s20 = sadd.s32 %s13, 1
    %s21 = ssub.s32 %s13, %s20
    %p22 = scmp.eq.s32.totalorder %s21, 0
    %s24 = sadd.s32 %s23, 1
    %s25 = scalar_select %p22, %s23, %s24
    %p28 = pneg %p22
    %p29 = scmp.eq.s32.totalorder %s13, 1
    %p30 = por %p28, %p29
    %p31 = scmp.ne.s32.totalorder %s23, %s26
    %p32 = scmp.eq.s32.totalorder %s13, 0
    %p33 = por %p31, %p32
    %p34 = scmp.ne.s32.totalorder %s23, %s26
    %p35 = scmp.eq.s32.totalorder %s18, 1
    %p36 = por %p34, %p35
    %p37 = scmp.ne.s32.totalorder %s26, %s27
    %p38 = scmp.eq.s32.totalorder %s18, 0
    %p39 = por %p37, %p38
    %p40 = scmp.ne.s32.totalorder %s26, %s27
    %p41 = scmp.eq.s32.totalorder %s19, 1
    %p42 = por %p40, %p41
    %p44 = scmp.ne.s32.totalorder %s27, %s43
    %p45 = scmp.eq.s32.totalorder %s19, 0
    %p46 = por %p44, %p45
    %s48 = sadd.s32 %s47, 1
    %p51 = scmp.eq.s32.totalorder %s13, 1
    %p52 = scmp.ne.s32.totalorder %s47, %s49
    %p53 = scmp.eq.s32.totalorder %s13, 0
    %p54 = por %p52, %p53
    %p55 = scmp.ne.s32.totalorder %s47, %s49
    %p56 = scmp.eq.s32.totalorder %s18, 1
    %p57 = por %p55, %p56
    %p58 = scmp.ne.s32.totalorder %s49, %s50
    %p59 = scmp.eq.s32.totalorder %s18, 0
    %p60 = por %p58, %p59
    %p61 = scmp.ne.s32.totalorder %s49, %s50
    %p62 = scmp.eq.s32.totalorder %s19, 1
    %p63 = por %p61, %p62
    %p65 = scmp.ne.s32.totalorder %s50, %s64
    %p66 = scmp.eq.s32.totalorder %s19, 0
    %p67 = por %p65, %p66
    %s69 = sadd.s32 %s68, 1
    %p72 = scmp.eq.s32.totalorder %s13, 1
    %p73 = scmp.ne.s32.totalorder %s68, %s70
    %p74 = scmp.eq.s32.totalorder %s13, 0
    %p75 = por %p73, %p74
    %p76 = scmp.ne.s32.totalorder %s68, %s70
    %p77 = scmp.eq.s32.totalorder %s18, 1
    %p78 = por %p76, %p77
    %p79 = scmp.ne.s32.totalorder %s70, %s71
    %p80 = scmp.eq.s32.totalorder %s18, 0
    %p81 = por %p79, %p80
    %p82 = scmp.ne.s32.totalorder %s70, %s71
    %p83 = scmp.eq.s32.totalorder %s19, 1
    %p84 = por %p82, %p83
    %p86 = scmp.ne.s32.totalorder %s71, %s85
    %p87 = scmp.eq.s32.totalorder %s19, 0
    %p88 = por %p86, %p87
    %s90 = sadd.s32 %s89, 1
    %p93 = scmp.eq.s32.totalorder %s13, 1
    %p94 = scmp.ne.s32.totalorder %s89, %s91
    %p95 = scmp.eq.s32.totalorder %s13, 0
    %p96 = por %p94, %p95
    %p97 = scmp.ne.s32.totalorder %s89, %s91
    %p98 = scmp.eq.s32.totalorder %s18, 1
    %p99 = por %p97, %p98
    %p100 = scmp.ne.s32.totalorder %s91, %s92
    %p101 = scmp.eq.s32.totalorder %s18, 0
    %p102 = por %p100, %p101
    %p103 = scmp.ne.s32.totalorder %s91, %s92
    %p104 = scmp.eq.s32.totalorder %s19, 1
    %p105 = por %p103, %p104
    %p107 = scmp.ne.s32.totalorder %s92, %s106
    %p108 = scmp.eq.s32.totalorder %s19, 0
    %p109 = por %p107, %p108
    %s111 = sadd.s32 %s110, 1
    %p114 = scmp.eq.s32.totalorder %s13, 1
    %p115 = scmp.ne.s32.totalorder %s110, %s112
    %p116 = scmp.eq.s32.totalorder %s13, 0
    %p117 = por %p115, %p116
    %p118 = scmp.ne.s32.totalorder %s110, %s112
    %p119 = scmp.eq.s32.totalorder %s18, 1
    %p120 = por %p118, %p119
    %p121 = scmp.ne.s32.totalorder %s112, %s113
    %p122 = scmp.eq.s32.totalorder %s18, 0
    %p123 = por %p121, %p122
    %p124 = scmp.ne.s32.totalorder %s112, %s113
    %p125 = scmp.eq.s32.totalorder %s19, 1
    %p126 = por %p124, %p125
    %p128 = scmp.ne.s32.totalorder %s113, %s127
    %p129 = scmp.eq.s32.totalorder %s19, 0
    %p130 = por %p128, %p129
    %s132 = sadd.s32 %s131, 1
    %p135 = scmp.eq.s32.totalorder %s13, 1
    %p136 = scmp.ne.s32.totalorder %s131, %s133
    %p137 = scmp.eq.s32.totalorder %s13, 0
    %p138 = por %p136, %p137
    %p139 = scmp.ne.s32.totalorder %s131, %s133
    %p140 = scmp.eq.s32.totalorder %s18, 1
    %p141 = por %p139, %p140
    %p142 = scmp.ne.s32.totalorder %s133, %s134
    %p143 = scmp.eq.s32.totalorder %s18, 0
    %p144 = por %p142, %p143
    %p145 = scmp.ne.s32.totalorder %s133, %s134
    %p146 = scmp.eq.s32.totalorder %s19, 1
    %p147 = por %p145, %p146
    %p149 = scmp.ne.s32.totalorder %s134, %s148
    %p150 = scmp.eq.s32.totalorder %s19, 0
    %p151 = por %p149, %p150
    %s153 = sadd.s32 %s152, 1
    %p156 = scmp.eq.s32.totalorder %s13, 1
    %p157 = scmp.ne.s32.totalorder %s152, %s154
    %p158 = scmp.eq.s32.totalorder %s13, 0
    %p159 = por %p157, %p158
    %p160 = scmp.ne.s32.totalorder %s152, %s154
    %p161 = scmp.eq.s32.totalorder %s18, 1
    %p162 = por %p160, %p161
    %p163 = scmp.ne.s32.totalorder %s154, %s155
    %p164 = scmp.eq.s32.totalorder %s18, 0
    %p165 = por %p163, %p164
    %p166 = scmp.ne.s32.totalorder %s154, %s155
    %p167 = scmp.eq.s32.totalorder %s19, 1
    %p168 = por %p166, %p167
    %p170 = scmp.ne.s32.totalorder %s155, %s169
    %p171 = scmp.eq.s32.totalorder %s19, 0
    %p172 = por %p170, %p171
    %s173 = ssub.s32 %s13, %s20
    %p174 = scmp.eq.s32.totalorder %s173, 0
    %s176 = sadd.s32 %s175, 1
    %s177 = scalar_select %p174, %s175, %s176
    %p180 = pneg %p174
    %p181 = scmp.eq.s32.totalorder %s13, 1
    %p182 = por %p180, %p181
    %p183 = scmp.ne.s32.totalorder %s175, %s178
    %p184 = scmp.eq.s32.totalorder %s13, 0
    %p185 = por %p183, %p184
    %p186 = scmp.ne.s32.totalorder %s175, %s178
    %p187 = scmp.eq.s32.totalorder %s18, 1
    %p188 = por %p186, %p187
    %p189 = scmp.ne.s32.totalorder %s178, %s179
    %p190 = scmp.eq.s32.totalorder %s18, 0
    %p191 = por %p189, %p190
    %p192 = scmp.ne.s32.totalorder %s178, %s179
    %p193 = scmp.eq.s32.totalorder %s19, 1
    %p194 = por %p192, %p193
    %p196 = scmp.ne.s32.totalorder %s179, %s195
    %p197 = scmp.eq.s32.totalorder %s19, 0
    %p198 = por %p196, %p197
    %p199 = scmp.le.s32.totalorder 1, %s13
    %p200 = scmp.lt.s32.totalorder %s13, 3
    %p201 = pnand %p199, %p200
    %p202 = pneg %p201
    // Predicated region
    $region9: #{rrconv_pallas.1} parent=5 // pred_check
      _
    $region10: #{rrconv_pallas.1} parent=5 // pred_check_branch
      %204 = sbr.rel (%p201) target = $region12
    $region11: #{rrconv_pallas.1} parent=5 // pred_region
      %s205 = ssub.s32 %s13, 1
      // Predicated region
      $region13: #{rrconv_pallas.1} parent=11 // pred_check
        %p206 = pneg %p60
      $region14: #{rrconv_pallas.1} parent=11 // pred_check_branch
        %208 = sbr.rel (%p206) target = $region16
      $region15: #{rrconv_pallas.1} parent=11 // pred_region
        _
      $region16: #{rrconv_pallas.1} parent=11 // pred_fallthru
        _
      // Predicated region
      $region17: #{rrconv_pallas.1} parent=11 // pred_check
        %p209 = pneg %p81
      $region18: #{rrconv_pallas.1} parent=11 // pred_check_branch
        %211 = sbr.rel (%p209) target = $region20
      $region19: #{rrconv_pallas.1} parent=11 // pred_region
        _
      $region20: #{rrconv_pallas.1} parent=11 // pred_fallthru
        _
      // Predicated region
      $region21: #{rrconv_pallas.1} parent=11 // pred_check
        %p212 = pneg %p102
      $region22: #{rrconv_pallas.1} parent=11 // pred_check_branch
        %214 = sbr.rel (%p212) target = $region24
      $region23: #{rrconv_pallas.1} parent=11 // pred_region
        _
      $region24: #{rrconv_pallas.1} parent=11 // pred_fallthru
        _
      // Predicated region
      $region25: #{rrconv_pallas.1} parent=11 // pred_check
        %p215 = pneg %p123
      $region26: #{rrconv_pallas.1} parent=11 // pred_check_branch
        %217 = sbr.rel (%p215) target = $region28
      $region27: #{rrconv_pallas.1} parent=11 // pred_region
        _
      $region28: #{rrconv_pallas.1} parent=11 // pred_fallthru
        _
      // Predicated region
      $region29: #{rrconv_pallas.1} parent=11 // pred_check
        %p218 = pneg %p144
      $region30: #{rrconv_pallas.1} parent=11 // pred_check_branch
        %220 = sbr.rel (%p218) target = $region32
      $region31: #{rrconv_pallas.1} parent=11 // pred_region
        _
      $region32: #{rrconv_pallas.1} parent=11 // pred_fallthru
        _
      // Predicated region
      $region33: #{rrconv_pallas.1} parent=11 // pred_check
        %p221 = pneg %p165
      $region34: #{rrconv_pallas.1} parent=11 // pred_check_branch
        %223 = sbr.rel (%p221) target = $region36
      $region35: #{rrconv_pallas.1} parent=11 // pred_region
        _
      $region36: #{rrconv_pallas.1} parent=11 // pred_fallthru
        _
    $region12: #{rrconv_pallas.1} parent=5 // pred_fallthru
      _
    %p224 = scmp.lt.s32.totalorder %s13, 2
    // Predicated region
    $region37: #{rrconv_pallas.1} parent=5 // pred_check
      %p225 = pneg %p224
    $region38: #{rrconv_pallas.1} parent=5 // pred_check_branch
      %227 = sbr.rel (%p225) target = $region40
    $region39: #{rrconv_pallas.1} parent=5 // pred_region
      // Predicated region
      $region41: #{rrconv_pallas.1} parent=39 // pred_check
        %p228 = pneg %p33
      $region42: #{rrconv_pallas.1} parent=39 // pred_check_branch
        %230 = sbr.rel (%p228) target = $region44
      $region43: #{rrconv_pallas.1} parent=39 // pred_region
        %p231 = scmp.lt.s32.totalorder %s13, 1
        %s232 = scalar_select %p231, %s13, 1
        %s233 = smul.addr %s232, 6
        %s234 = smul.addr %s233, 4
        %s235 = scalar_lea.vmem %s0, %s234
      $region44: #{rrconv_pallas.1} parent=39 // pred_fallthru
        _
    $region40: #{rrconv_pallas.1} parent=5 // pred_fallthru
      _
    %p236 = scmp.le.s32.totalorder 1, %s13
    %p237 = scmp.lt.s32.totalorder %s13, 3
    %p238 = pnand %p236, %p237
    %p239 = pneg %p238
    // Predicated region
    $region45: #{rrconv_pallas.1} parent=5 // pred_check
      _
    $region46: #{rrconv_pallas.1} parent=5 // pred_check_branch
      %241 = sbr.rel (%p238) target = $region48
    $region47: #{rrconv_pallas.1} parent=5 // pred_region
      %s242 = ssub.s32 %s13, 1
      %p243 = scmp.lt.s32.totalorder %s18, 1
      %s244 = scalar_select %p243, %s18, 1
      %s245 = smul.addr %s244, 6
      %s246 = smul.addr %s245, 4
      %s247 = scalar_lea.vmem %s0, %s246
      %p248 = pneg %p39
      %p249 = pneg %p36
      %p250 = pneg %p60
      %p251 = pneg %p57
      %p252 = pneg %p81
      %p253 = pneg %p78
      %p254 = pneg %p102
      %p255 = pneg %p99
      %p256 = pneg %p123
      %p257 = pneg %p120
      %p258 = pneg %p144
      %p259 = pneg %p141
      %p260 = pneg %p165
      %p261 = pneg %p162
      %p262 = pneg %p191
      %p263 = pneg %p188
      %p264 = scmp.lt.s32.totalorder %s18, 1
      %s265 = scalar_select %p264, %s18, 1
      %s266 = smul.addr %s265, 6
      %s267 = smul.addr %s266, 8
      %s268 = scalar_lea.vmem %s7, %s267
      %p269 = scmp.lt.s32.totalorder %s18, 1
      %s270 = scalar_select %p269, %s18, 1
      %s271 = smul.addr %s270, 6
      %s272 = smul.addr %s271, 4
      %s273 = scalar_lea.vmem %s0, %s272
      %p274 = scmp.lt.s32.totalorder %s18, 1
      %s275 = scalar_select %p274, %s18, 1
      %s276 = smul.addr %s275, 6
      %s277 = smul.addr %s276, 8
      %s278 = scalar_lea.vmem %s7, %s277
      %vm279 = vcmask 388096
      %280 = vst.msk [vmem:[#allocation2] sm:$0xf] %vm279, 0.0
      %vm281 = vcmask 1043904
      %vm282 = vcmask 1047556
      %vm283 = vmor %vm282, %vm281
      %284 = vst.msk [vmem:[#allocation2 + $0x14] sm:$0xff] %vm283, 0.0
      %285 = vst.msk [vmem:[#allocation2 + $0x1c] sm:$0xf] %vm279, 0.0
      %v286 = vld [vmem:[%s273] sm:$0xff]
      %v287 = vld [vmem:[%s273 + $0x8] sm:$0xff]
      %v288 = vld [vmem:[%s273 + $0x10] sm:$0xff]
      %292 = vrot.lane.b32.xlu0 %v286, 48
      %v293 = vpop.permute.xlu0 %292
      %294 = vrot.lane.b32.xlu0 %v287, 48
      %v295 = vpop.permute.xlu0 %294
      %296 = vrot.lane.b32.xlu0 %v288, 48
      %v297 = vpop.permute.xlu0 %296
      %v298 = vrot.slane %v293, 4
      %v299 = vrot.slane %v295, 4
      %v300 = vrot.slane %v297, 4
      %vm301 = vcmask 392192
      %v302 = vsel %vm301, %v298, %v293
      %vm303 = vcmask 1043456
      %v304 = vsel %vm303, %v298, %v299
      %v305 = vsel %vm301, %v304, %v295
      %v306 = vsel %vm303, %v299, %v300
      %v307 = vsel %vm301, %v306, %v297
      %vm311 = vcmask 1043840
      %vm312 = vmor %vm282, %vm311
      %313 = vst.msk [vmem:[#allocation2] sm:$0xff] %vm312, %v302
      %314 = vst [vmem:[#allocation2 + $0x8] sm:$0xff] %v305
      %vm315 = vcmask 457732
      %vm316 = vmor %vm315, %vm303
      %317 = vst.msk [vmem:[#allocation2 + $0x10] sm:$0xff] %vm316, %v307
      %v318 = vld [vmem:[%s1] sm:$0xff]
      %v319 = vld [vmem:[%s1 + $0x8] sm:$0xff]
      %v320 = vld [vmem:[%s2] sm:$0xff]
      %v321 = vld [vmem:[%s3] sm:$0xff]
      %v322 = vld [vmem:[%s4] sm:$0xff]
      %v323 = vld [vmem:[%s5] sm:$0xf]
      %v324 = vld [vmem:[%s6] sm:$0xf]
      %v325 = vld [vmem:[#allocation2] sm:$0xff]
      %v326 = vld [vmem:[#allocation2 + $0x8] sm:$0xff]
      %v327 = vld [vmem:[#allocation2 + $0x10] sm:$0xff]
      %v328 = vld [vmem:[#allocation2 + $0x18] sm:$0xff]
      %v333 = vcombine.high %v325, %v325
      %v334 = vcombine.high %v326, %v326
      %v335 = vcombine.high %v327, %v327
      %v336 = vcombine.high %v328, %v328
      %337 = vrot.lane.b32.xlu0 %v325, 123
      %v338 = vpop.permute.xlu0 %337
      %339 = vrot.lane.b32.xlu0 %v333, 123
      %v340 = vpop.permute.xlu0 %339
      %341 = vrot.lane.b32.xlu0 %v326, 123
      %v342 = vpop.permute.xlu0 %341
      %343 = vrot.lane.b32.xlu0 %v334, 123
      %v344 = vpop.permute.xlu0 %343
      %345 = vrot.lane.b32.xlu0 %v327, 123
      %v346 = vpop.permute.xlu0 %345
      %347 = vrot.lane.b32.xlu0 %v335, 123
      %v348 = vpop.permute.xlu0 %347
      %349 = vrot.lane.b32.xlu0 %v328, 123
      %v350 = vpop.permute.xlu0 %349
      %351 = vrot.lane.b32.xlu0 %v336, 123
      %v352 = vpop.permute.xlu0 %351
      %vm353 = vcmask 1006592
      %v354 = vsel %vm353, %v338, %v340
      %v355 = vsel %vm353, %v340, %v342
      %v356 = vsel %vm353, %v342, %v344
      %v357 = vsel %vm353, %v344, %v346
      %v358 = vsel %vm353, %v346, %v348
      %v359 = vsel %vm353, %v348, %v350
      %v360 = vsel %vm353, %v350, %v352
      %368 = vst [vmem:[#allocation3] sm:$0xf] %v354
      %369 = vst [vmem:[#allocation3 + $0x8] sm:$0xf] %v355
      %370 = vst [vmem:[#allocation3 + $0x10] sm:$0xf] %v356
      %371 = vst [vmem:[#allocation3 + $0x18] sm:$0xf] %v357
      %372 = vst [vmem:[#allocation3 + $0x20] sm:$0xf] %v358
      %373 = vst [vmem:[#allocation3 + $0x28] sm:$0xf] %v359
      %374 = vst [vmem:[#allocation3 + $0x30] sm:$0xf] %v360
      %v375 = vld [vmem:[#allocation2] sm:$0xff]
      %v376 = vld [vmem:[#allocation2 + $0x8] sm:$0xff]
      %v377 = vld [vmem:[#allocation2 + $0x10] sm:$0xff]
      %v378 = vld [vmem:[#allocation2 + $0x18] sm:$0xff]
      %v383 = vcombine.low %v375, %v375
      %v384 = vcombine.low %v376, %v376
      %v385 = vcombine.low %v377, %v377
      %v386 = vcombine.low %v378, %v378
      %387 = vrot.lane.b32.xlu0 %v383, 122
      %v388 = vpop.permute.xlu0 %387
      %389 = vrot.lane.b32.xlu0 %v375, 122
      %v390 = vpop.permute.xlu0 %389
      %391 = vrot.lane.b32.xlu0 %v384, 122
      %v392 = vpop.permute.xlu0 %391
      %393 = vrot.lane.b32.xlu0 %v376, 122
      %v394 = vpop.permute.xlu0 %393
      %395 = vrot.lane.b32.xlu0 %v385, 122
      %v396 = vpop.permute.xlu0 %395
      %397 = vrot.lane.b32.xlu0 %v377, 122
      %v398 = vpop.permute.xlu0 %397
      %399 = vrot.lane.b32.xlu0 %v386, 122
      %v400 = vpop.permute.xlu0 %399
      %401 = vrot.lane.b32.xlu0 %v378, 122
      %v402 = vpop.permute.xlu0 %401
      %vm403 = vcmask 998400
      %v404 = vsel %vm403, %v388, %v390
      %v405 = vsel %vm403, %v390, %v392
      %v406 = vsel %vm403, %v392, %v394
      %v407 = vsel %vm403, %v394, %v396
      %v408 = vsel %vm403, %v396, %v398
      %v409 = vsel %vm403, %v398, %v400
      %v410 = vsel %vm403, %v400, %v402
      %418 = vst [vmem:[#allocation3] sm:$0xf0] %v404
      %419 = vst [vmem:[#allocation3 + $0x8] sm:$0xf0] %v405
      %420 = vst [vmem:[#allocation3 + $0x10] sm:$0xf0] %v406
      %421 = vst [vmem:[#allocation3 + $0x18] sm:$0xf0] %v407
      %422 = vst [vmem:[#allocation3 + $0x20] sm:$0xf0] %v408
      %423 = vst [vmem:[#allocation3 + $0x28] sm:$0xf0] %v409
      %424 = vst [vmem:[#allocation3 + $0x30] sm:$0xf0] %v410
      %v425 = vld [vmem:[#allocation2] sm:$0xff]
      %v426 = vld [vmem:[#allocation2 + $0x8] sm:$0xff]
      %v427 = vld [vmem:[#allocation2 + $0x10] sm:$0xff]
      %v428 = vld [vmem:[#allocation2 + $0x18] sm:$0xff]
      %v433 = vcombine.high %v425, %v425
      %v434 = vcombine.high %v426, %v426
      %v435 = vcombine.high %v427, %v427
      %v436 = vcombine.high %v428, %v428
      %437 = vrot.lane.b32.xlu0 %v425, 121
      %v438 = vpop.permute.xlu0 %437
      %439 = vrot.lane.b32.xlu0 %v433, 121
      %v440 = vpop.permute.xlu0 %439
      %441 = vrot.lane.b32.xlu0 %v426, 121
      %v442 = vpop.permute.xlu0 %441
      %443 = vrot.lane.b32.xlu0 %v434, 121
      %v444 = vpop.permute.xlu0 %443
      %445 = vrot.lane.b32.xlu0 %v427, 121
      %v446 = vpop.permute.xlu0 %445
      %447 = vrot.lane.b32.xlu0 %v435, 121
      %v448 = vpop.permute.xlu0 %447
      %449 = vrot.lane.b32.xlu0 %v428, 121
      %v450 = vpop.permute.xlu0 %449
      %451 = vrot.lane.b32.xlu0 %v436, 121
      %v452 = vpop.permute.xlu0 %451
      %vm453 = vcmask 990208
      %v454 = vsel %vm453, %v438, %v440
      %v455 = vsel %vm453, %v440, %v442
      %v456 = vsel %vm453, %v442, %v444
      %v457 = vsel %vm453, %v444, %v446
      %v458 = vsel %vm453, %v446, %v448
      %v459 = vsel %vm453, %v448, %v450
      %v460 = vsel %vm453, %v450, %v452
      %468 = vst [vmem:[#allocation3 + $0x38] sm:$0xf] %v454
      %469 = vst [vmem:[#allocation3 + $0x40] sm:$0xf] %v455
      %470 = vst [vmem:[#allocation3 + $0x48] sm:$0xf] %v456
      %471 = vst [vmem:[#allocation3 + $0x50] sm:$0xf] %v457
      %472 = vst [vmem:[#allocation3 + $0x58] sm:$0xf] %v458
      %473 = vst [vmem:[#allocation3 + $0x60] sm:$0xf] %v459
      %474 = vst [vmem:[#allocation3 + $0x68] sm:$0xf] %v460
      %v475 = vld [vmem:[#allocation2] sm:$0xff]
      %v476 = vld [vmem:[#allocation2 + $0x8] sm:$0xff]
      %v477 = vld [vmem:[#allocation2 + $0x10] sm:$0xff]
      %v478 = vld [vmem:[#allocation2 + $0x18] sm:$0xff]
      %v483 = vcombine.low %v475, %v475
      %v484 = vcombine.low %v476, %v476
      %v485 = vcombine.low %v477, %v477
      %v486 = vcombine.low %v478, %v478
      %487 = vrot.lane.b32.xlu0 %v483, 105
      %v488 = vpop.permute.xlu0 %487
      %489 = vrot.lane.b32.xlu0 %v475, 105
      %v490 = vpop.permute.xlu0 %489
      %491 = vrot.lane.b32.xlu0 %v484, 105
      %v492 = vpop.permute.xlu0 %491
      %493 = vrot.lane.b32.xlu0 %v476, 105
      %v494 = vpop.permute.xlu0 %493
      %495 = vrot.lane.b32.xlu0 %v485, 105
      %v496 = vpop.permute.xlu0 %495
      %497 = vrot.lane.b32.xlu0 %v477, 105
      %v498 = vpop.permute.xlu0 %497
      %499 = vrot.lane.b32.xlu0 %v486, 105
      %v500 = vpop.permute.xlu0 %499
      %501 = vrot.lane.b32.xlu0 %v478, 105
      %v502 = vpop.permute.xlu0 %501
      %vm503 = vcmask 859136
      %v504 = vsel %vm503, %v488, %v490
      %v505 = vsel %vm503, %v490, %v492
      %v506 = vsel %vm503, %v492, %v494
      %v507 = vsel %vm503, %v494, %v496
      %v508 = vsel %vm503, %v496, %v498
      %v509 = vsel %vm503, %v498, %v500
      %v510 = vsel %vm503, %v500, %v502
      %518 = vst [vmem:[#allocation3 + $0x38] sm:$0xf0] %v504
      %519 = vst [vmem:[#allocation3 + $0x40] sm:$0xf0] %v505
      %520 = vst [vmem:[#allocation3 + $0x48] sm:$0xf0] %v506
      %521 = vst [vmem:[#allocation3 + $0x50] sm:$0xf0] %v507
      %522 = vst [vmem:[#allocation3 + $0x58] sm:$0xf0] %v508
      %523 = vst [vmem:[#allocation3 + $0x60] sm:$0xf0] %v509
      %524 = vst [vmem:[#allocation3 + $0x68] sm:$0xf0] %v510
      %v525 = vld [vmem:[#allocation2] sm:$0xff]
      %v526 = vld [vmem:[#allocation2 + $0x8] sm:$0xff]
      %v527 = vld [vmem:[#allocation2 + $0x10] sm:$0xff]
      %v528 = vld [vmem:[#allocation2 + $0x18] sm:$0xff]
      %v533 = vcombine.high %v525, %v525
      %v534 = vcombine.high %v526, %v526
      %v535 = vcombine.high %v527, %v527
      %v536 = vcombine.high %v528, %v528
      %537 = vrot.lane.b32.xlu0 %v525, 104
      %v538 = vpop.permute.xlu0 %537
      %539 = vrot.lane.b32.xlu0 %v533, 104
      %v540 = vpop.permute.xlu0 %539
      %541 = vrot.lane.b32.xlu0 %v526, 104
      %v542 = vpop.permute.xlu0 %541
      %543 = vrot.lane.b32.xlu0 %v534, 104
      %v544 = vpop.permute.xlu0 %543
      %545 = vrot.lane.b32.xlu0 %v527, 104
      %v546 = vpop.permute.xlu0 %545
      %547 = vrot.lane.b32.xlu0 %v535, 104
      %v548 = vpop.permute.xlu0 %547
      %549 = vrot.lane.b32.xlu0 %v528, 104
      %v550 = vpop.permute.xlu0 %549
      %551 = vrot.lane.b32.xlu0 %v536, 104
      %v552 = vpop.permute.xlu0 %551
      %vm553 = vcmask 850944
      %v554 = vsel %vm553, %v538, %v540
      %v555 = vsel %vm553, %v540, %v542
      %v556 = vsel %vm553, %v542, %v544
      %v557 = vsel %vm553, %v544, %v546
      %v558 = vsel %vm553, %v546, %v548
      %v559 = vsel %vm553, %v548, %v550
      %v560 = vsel %vm553, %v550, %v552
      %568 = vst [vmem:[#allocation3 + $0x70] sm:$0xf] %v554
      %569 = vst [vmem:[#allocation3 + $0x78] sm:$0xf] %v555
      %570 = vst [vmem:[#allocation3 + $0x80] sm:$0xf] %v556
      %571 = vst [vmem:[#allocation3 + $0x88] sm:$0xf] %v557
      %572 = vst [vmem:[#allocation3 + $0x90] sm:$0xf] %v558
      %573 = vst [vmem:[#allocation3 + $0x98] sm:$0xf] %v559
      %574 = vst [vmem:[#allocation3 + $0xa0] sm:$0xf] %v560
      %v575 = vld [vmem:[#allocation2] sm:$0xff]
      %v576 = vld [vmem:[#allocation2 + $0x8] sm:$0xff]
      %v577 = vld [vmem:[#allocation2 + $0x10] sm:$0xff]
      %v578 = vld [vmem:[#allocation2 + $0x18] sm:$0xff]
      %v583 = vcombine.low %v575, %v575
      %v584 = vcombine.low %v576, %v576
      %v585 = vcombine.low %v577, %v577
      %v586 = vcombine.low %v578, %v578
      %587 = vrot.lane.b32.xlu0 %v583, 103
      %v588 = vpop.permute.xlu0 %587
      %589 = vrot.lane.b32.xlu0 %v575, 103
      %v590 = vpop.permute.xlu0 %589
      %591 = vrot.lane.b32.xlu0 %v584, 103
      %v592 = vpop.permute.xlu0 %591
      %593 = vrot.lane.b32.xlu0 %v576, 103
      %v594 = vpop.permute.xlu0 %593
      %595 = vrot.lane.b32.xlu0 %v585, 103
      %v596 = vpop.permute.xlu0 %595
      %597 = vrot.lane.b32.xlu0 %v577, 103
      %v598 = vpop.permute.xlu0 %597
      %599 = vrot.lane.b32.xlu0 %v586, 103
      %v600 = vpop.permute.xlu0 %599
      %601 = vrot.lane.b32.xlu0 %v578, 103
      %v602 = vpop.permute.xlu0 %601
      %vm603 = vcmask 842752
      %v604 = vsel %vm603, %v588, %v590
      %v605 = vsel %vm603, %v590, %v592
      %v606 = vsel %vm603, %v592, %v594
      %v607 = vsel %vm603, %v594, %v596
      %v608 = vsel %vm603, %v596, %v598
      %v609 = vsel %vm603, %v598, %v600
      %v610 = vsel %vm603, %v600, %v602
      %618 = vst [vmem:[#allocation3 + $0x70] sm:$0xf0] %v604
      %619 = vst [vmem:[#allocation3 + $0x78] sm:$0xf0] %v605
      %620 = vst [vmem:[#allocation3 + $0x80] sm:$0xf0] %v606
      %621 = vst [vmem:[#allocation3 + $0x88] sm:$0xf0] %v607
      %622 = vst [vmem:[#allocation3 + $0x90] sm:$0xf0] %v608
      %623 = vst [vmem:[#allocation3 + $0x98] sm:$0xf0] %v609
      %624 = vst [vmem:[#allocation3 + $0xa0] sm:$0xf0] %v610
      %v625 = vld [vmem:[#allocation2] sm:$0xff]
      %v626 = vld [vmem:[#allocation2 + $0x8] sm:$0xff]
      %v627 = vld [vmem:[#allocation2 + $0x10] sm:$0xff]
      %v628 = vld [vmem:[#allocation2 + $0x18] sm:$0xff]
      %v633 = vcombine.high %v625, %v625
      %v634 = vcombine.high %v626, %v626
      %v635 = vcombine.high %v627, %v627
      %v636 = vcombine.high %v628, %v628
      %637 = vrot.lane.b32.xlu0 %v625, 87
      %v638 = vpop.permute.xlu0 %637
      %639 = vrot.lane.b32.xlu0 %v633, 87
      %v640 = vpop.permute.xlu0 %639
      %641 = vrot.lane.b32.xlu0 %v626, 87
      %v642 = vpop.permute.xlu0 %641
      %643 = vrot.lane.b32.xlu0 %v634, 87
      %v644 = vpop.permute.xlu0 %643
      %645 = vrot.lane.b32.xlu0 %v627, 87
      %v646 = vpop.permute.xlu0 %645
      %647 = vrot.lane.b32.xlu0 %v635, 87
      %v648 = vpop.permute.xlu0 %647
      %649 = vrot.lane.b32.xlu0 %v628, 87
      %v650 = vpop.permute.xlu0 %649
      %651 = vrot.lane.b32.xlu0 %v636, 87
      %v652 = vpop.permute.xlu0 %651
      %vm653 = vcmask 711680
      %v654 = vsel %vm653, %v638, %v640
      %v655 = vsel %vm653, %v640, %v642
      %v656 = vsel %vm653, %v642, %v644
      %v657 = vsel %vm653, %v644, %v646
      %v658 = vsel %vm653, %v646, %v648
      %v659 = vsel %vm653, %v648, %v650
      %v660 = vsel %vm653, %v650, %v652
      %668 = vst [vmem:[#allocation3 + $0xa8] sm:$0xf] %v654
      %669 = vst [vmem:[#allocation3 + $0xb0] sm:$0xf] %v655
      %670 = vst [vmem:[#allocation3 + $0xb8] sm:$0xf] %v656
      %671 = vst [vmem:[#allocation3 + $0xc0] sm:$0xf] %v657
      %672 = vst [vmem:[#allocation3 + $0xc8] sm:$0xf] %v658
      %673 = vst [vmem:[#allocation3 + $0xd0] sm:$0xf] %v659
      %674 = vst [vmem:[#allocation3 + $0xd8] sm:$0xf] %v660
      %v675 = vld [vmem:[#allocation2] sm:$0xff]
      %v676 = vld [vmem:[#allocation2 + $0x8] sm:$0xff]
      %v677 = vld [vmem:[#allocation2 + $0x10] sm:$0xff]
      %v678 = vld [vmem:[#allocation2 + $0x18] sm:$0xff]
      %v683 = vcombine.low %v675, %v675
      %v684 = vcombine.low %v676, %v676
      %v685 = vcombine.low %v677, %v677
      %v686 = vcombine.low %v678, %v678
      %687 = vrot.lane.b32.xlu0 %v683, 86
      %v688 = vpop.permute.xlu0 %687
      %689 = vrot.lane.b32.xlu0 %v675, 86
      %v690 = vpop.permute.xlu0 %689
      %691 = vrot.lane.b32.xlu0 %v684, 86
      %v692 = vpop.permute.xlu0 %691
      %693 = vrot.lane.b32.xlu0 %v676, 86
      %v694 = vpop.permute.xlu0 %693
      %695 = vrot.lane.b32.xlu0 %v685, 86
      %v696 = vpop.permute.xlu0 %695
      %697 = vrot.lane.b32.xlu0 %v677, 86
      %v698 = vpop.permute.xlu0 %697
      %699 = vrot.lane.b32.xlu0 %v686, 86
      %v700 = vpop.permute.xlu0 %699
      %701 = vrot.lane.b32.xlu0 %v678, 86
      %v702 = vpop.permute.xlu0 %701
      %vm703 = vcmask 703488
      %v704 = vsel %vm703, %v688, %v690
      %v705 = vsel %vm703, %v690, %v692
      %v706 = vsel %vm703, %v692, %v694
      %v707 = vsel %vm703, %v694, %v696
      %v708 = vsel %vm703, %v696, %v698
      %v709 = vsel %vm703, %v698, %v700
      %v710 = vsel %vm703, %v700, %v702
      %718 = vst [vmem:[#allocation3 + $0xa8] sm:$0xf0] %v704
      %719 = vst [vmem:[#allocation3 + $0xb0] sm:$0xf0] %v705
      %720 = vst [vmem:[#allocation3 + $0xb8] sm:$0xf0] %v706
      %721 = vst [vmem:[#allocation3 + $0xc0] sm:$0xf0] %v707
      %722 = vst [vmem:[#allocation3 + $0xc8] sm:$0xf0] %v708
      %723 = vst [vmem:[#allocation3 + $0xd0] sm:$0xf0] %v709
      %724 = vst [vmem:[#allocation3 + $0xd8] sm:$0xf0] %v710
      %v725 = vld [vmem:[#allocation2] sm:$0xff]
      %v726 = vld [vmem:[#allocation2 + $0x8] sm:$0xff]
      %v727 = vld [vmem:[#allocation2 + $0x10] sm:$0xff]
      %v728 = vld [vmem:[#allocation2 + $0x18] sm:$0xff]
      %v733 = vcombine.high %v725, %v725
      %v734 = vcombine.high %v726, %v726
      %v735 = vcombine.high %v727, %v727
      %v736 = vcombine.high %v728, %v728
      %737 = vrot.lane.b32.xlu0 %v725, 85
      %v738 = vpop.permute.xlu0 %737
      %739 = vrot.lane.b32.xlu0 %v733, 85
      %v740 = vpop.permute.xlu0 %739
      %741 = vrot.lane.b32.xlu0 %v726, 85
      %v742 = vpop.permute.xlu0 %741
      %743 = vrot.lane.b32.xlu0 %v734, 85
      %v744 = vpop.permute.xlu0 %743
      %745 = vrot.lane.b32.xlu0 %v727, 85
      %v746 = vpop.permute.xlu0 %745
      %747 = vrot.lane.b32.xlu0 %v735, 85
      %v748 = vpop.permute.xlu0 %747
      %749 = vrot.lane.b32.xlu0 %v728, 85
      %v750 = vpop.permute.xlu0 %749
      %751 = vrot.lane.b32.xlu0 %v736, 85
      %v752 = vpop.permute.xlu0 %751
      %vm753 = vcmask 695296
      %v754 = vsel %vm753, %v738, %v740
      %v755 = vsel %vm753, %v740, %v742
      %v756 = vsel %vm753, %v742, %v744
      %v757 = vsel %vm753, %v744, %v746
      %v758 = vsel %vm753, %v746, %v748
      %v759 = vsel %vm753, %v748, %v750
      %v760 = vsel %vm753, %v750, %v752
      %768 = vst [vmem:[#allocation3 + $0xe0] sm:$0xf] %v754
      %769 = vst [vmem:[#allocation3 + $0xe8] sm:$0xf] %v755
      %770 = vst [vmem:[#allocation3 + $0xf0] sm:$0xf] %v756
      %771 = vst [vmem:[#allocation3 + $0xf8] sm:$0xf] %v757
      %772 = vst [vmem:[#allocation3 + $0x100] sm:$0xf] %v758
      %773 = vst [vmem:[#allocation3 + $0x108] sm:$0xf] %v759
      %774 = vst [vmem:[#allocation3 + $0x110] sm:$0xf] %v760
      %v775 = vld [vmem:[#allocation3] sm:$0xff]
      %v776 = vld [vmem:[#allocation3 + $0x8] sm:$0xff]
      %v777 = vld [vmem:[#allocation3 + $0x10] sm:$0xff]
      %v778 = vld [vmem:[#allocation3 + $0x18] sm:$0xff]
      %v779 = vld [vmem:[#allocation3 + $0x20] sm:$0xff]
      %v780 = vld [vmem:[#allocation3 + $0x28] sm:$0xff]
      %v781 = vld [vmem:[#allocation3 + $0x30] sm:$0xff]
      %v782 = vld [vmem:[#allocation3 + $0x38] sm:$0xff]
      %v783 = vld [vmem:[#allocation3 + $0x40] sm:$0xff]
      %v784 = vld [vmem:[#allocation3 + $0x48] sm:$0xff]
      %v785 = vld [vmem:[#allocation3 + $0x50] sm:$0xff]
      %v786 = vld [vmem:[#allocation3 + $0x58] sm:$0xff]
      %v787 = vld [vmem:[#allocation3 + $0x60] sm:$0xff]
      %v788 = vld [vmem:[#allocation3 + $0x68] sm:$0xff]
      %v789 = vld [vmem:[#allocation3 + $0x70] sm:$0xff]
      %v790 = vld [vmem:[#allocation3 + $0x78] sm:$0xff]
      %v791 = vld [vmem:[#allocation3 + $0x80] sm:$0xff]
      %v792 = vld [vmem:[#allocation3 + $0x88] sm:$0xff]
      %v793 = vld [vmem:[#allocation3 + $0x90] sm:$0xff]
      %v794 = vld [vmem:[#allocation3 + $0x98] sm:$0xff]
      %v795 = vld [vmem:[#allocation3 + $0xa0] sm:$0xff]
      %v796 = vld [vmem:[#allocation3 + $0xa8] sm:$0xff]
      %v797 = vld [vmem:[#allocation3 + $0xb0] sm:$0xff]
      %v798 = vld [vmem:[#allocation3 + $0xb8] sm:$0xff]
      %v799 = vld [vmem:[#allocation3 + $0xc0] sm:$0xff]
      %v800 = vld [vmem:[#allocation3 + $0xc8] sm:$0xff]
      %v801 = vld [vmem:[#allocation3 + $0xd0] sm:$0xff]
      %v802 = vld [vmem:[#allocation3 + $0xd8] sm:$0xff]
      %v803 = vld [vmem:[#allocation3 + $0xe0] sm:$0xf]
      %v804 = vld [vmem:[#allocation3 + $0xe8] sm:$0xf]
      %v805 = vld [vmem:[#allocation3 + $0xf0] sm:$0xf]
      %v806 = vld [vmem:[#allocation3 + $0xf8] sm:$0xf]
      %v807 = vld [vmem:[#allocation3 + $0x100] sm:$0xf]
      %v808 = vld [vmem:[#allocation3 + $0x108] sm:$0xf]
      %v809 = vld [vmem:[#allocation3 + $0x110] sm:$0xf]
      %vm810 = vcmask 293888
      %v812 = vsel %vm810, %v318, 0
      %v815 = vsel %vm810, %v319, 0
      %v818 = vsel %vm303, %v803, 0
      %v821 = vsel %vm303, %v804, 0
      %v824 = vsel %vm303, %v805, 0
      %v827 = vsel %vm303, %v806, 0
      %v830 = vsel %vm303, %v807, 0
      %v833 = vsel %vm303, %v808, 0
      %v836 = vsel %vm303, %v809, 0
      %838 = vmatprep.subr.mxu0 0.0
      %839 = vmatpush1.msra.mxu0 0.0
      %840 = vmatprep.subr.mxu0 0.0
      %841 = vmatpush1.msra.mxu0 0.0
      %842 = vmatprep.subr.mxu0 0.0
      %843 = vmatpush1.msra.mxu0 0.0
      %844 = vmatprep.subr.mxu0 0.0
      %845 = vmatpush1.msra.mxu0 0.0
      %846 = vmatprep.subr.mxu0 0.0
      %847 = vmatpush1.msra.mxu0 0.0
      %848 = vmatprep.subr.mxu0 0.0
      %849 = vmatpush1.msra.mxu0 0.0
      %850 = vmatprep.subr.mxu0 0.0
      %851 = vmatpush1.msra.mxu0 0.0
      %852 = vmatprep.subr.mxu0 0.0
      %853 = vmatpush1.msra.mxu0 0.0
      %854 = vmatprep.subr.mxu0 0.0
      %855 = vmatpush1.msra.mxu0 0.0
      %856 = vmatprep.subr.mxu0 0.0
      %857 = vmatpush1.msra.mxu0 0.0
      %858 = vmatprep.subr.mxu0 0.0
      %859 = vmatpush1.msra.mxu0 0.0
      %860 = vmatprep.subr.mxu0 %v821
      %861 = vmatpush1.msra.mxu0 %v818
      %862 = vmatprep.subr.mxu0 %v797
      %863 = vmatpush1.msra.mxu0 %v796
      %864 = vmatprep.subr.mxu0 %v790
      %865 = vmatpush1.msra.mxu0 %v789
      %866 = vmatprep.subr.mxu0 %v783
      %867 = vmatpush1.msra.mxu0 %v782
      %868 = vmatprep.subr.mxu0 %v776
      %869 = vmatpush1.msra.mxu0 %v775
      %870 = vmatprep.subr.mxu0 0.0
      %871 = vmatpush2.msra.mxu0 0.0
      %872 = vmatprep.subr.mxu0 0.0
      %873 = vmatpush2.msra.mxu0 0.0
      %874 = vmatprep.subr.mxu0 0.0
      %875 = vmatpush2.msra.mxu0 0.0
      %876 = vmatprep.subr.mxu0 0.0
      %877 = vmatpush2.msra.mxu0 0.0
      %878 = vmatprep.subr.mxu0 0.0
      %879 = vmatpush2.msra.mxu0 0.0
      %880 = vmatprep.subr.mxu0 0.0
      %881 = vmatpush2.msra.mxu0 0.0
      %882 = vmatprep.subr.mxu0 0.0
      %883 = vmatpush2.msra.mxu0 0.0
      %884 = vmatprep.subr.mxu0 0.0
      %885 = vmatpush2.msra.mxu0 0.0
      %886 = vmatprep.subr.mxu0 0.0
      %887 = vmatpush2.msra.mxu0 0.0
      %888 = vmatprep.subr.mxu0 0.0
      %889 = vmatpush2.msra.mxu0 0.0
      %890 = vmatprep.subr.mxu0 0.0
      %891 = vmatpush2.msra.mxu0 0.0
      %892 = vmatprep.subr.mxu0 0.0
      %893 = vmatpush2.msra.mxu0 0.0
      %894 = vmatprep.subr.mxu0 0.0
      %895 = vmatpush2.msra.mxu0 0.0
      %896 = vmatprep.subr.mxu0 0.0
      %897 = vmatpush2.msra.mxu0 0.0
      %898 = vmatprep.subr.mxu0 0.0
      %899 = vmatpush2.msra.mxu0 0.0
      %900 = vmatprep.subr.mxu0 0.0
      %901 = vmatpush2.msra.mxu0 0.0
      %902 = vmatprep.mubr.f32.mxu0 0.0
      %903 = vmatmul.mubr.f32.gmra.mxu0 %v812
      %v904 = vpop.f32.mrf.mxu0
      %v905 = vadd.f32 0.0, %v904
      %v906 = vpop.f32.mrf.mxu0
      %v907 = vadd.f32 0.0, %v906
      %908 = vmatprep.mubr.f32.mxu0 0.0
      %909 = vmatmul.mubr.f32.gmra.mxu0 %v815
      %v910 = vpop.f32.mrf.mxu0
      %v911 = vadd.f32 0.0, %v910
      %v912 = vpop.f32.mrf.mxu0
      %v913 = vadd.f32 0.0, %v912
      %914 = vdwg.mxu0
      %915 = vmatprep.subr.mxu0 0.0
      %916 = vmatpush1.msra.mxu0 0.0
      %917 = vmatprep.subr.mxu0 0.0
      %918 = vmatpush1.msra.mxu0 0.0
      %919 = vmatprep.subr.mxu0 0.0
      %920 = vmatpush1.msra.mxu0 0.0
      %921 = vmatprep.subr.mxu0 0.0
      %922 = vmatpush1.msra.mxu0 0.0
      %923 = vmatprep.subr.mxu0 0.0
      %924 = vmatpush1.msra.mxu0 0.0
      %925 = vmatprep.subr.mxu0 0.0
      %926 = vmatpush1.msra.mxu0 0.0
      %927 = vmatprep.subr.mxu0 0.0
      %928 = vmatpush1.msra.mxu0 0.0
      %929 = vmatprep.subr.mxu0 0.0
      %930 = vmatpush1.msra.mxu0 0.0
      %931 = vmatprep.subr.mxu0 0.0
      %932 = vmatpush1.msra.mxu0 0.0
      %933 = vmatprep.subr.mxu0 0.0
      %934 = vmatpush1.msra.mxu0 0.0
      %935 = vmatprep.subr.mxu0 0.0
      %936 = vmatpush1.msra.mxu0 0.0
      %937 = vmatprep.subr.mxu0 %v827
      %938 = vmatpush1.msra.mxu0 %v824
      %939 = vmatprep.subr.mxu0 %v799
      %940 = vmatpush1.msra.mxu0 %v798
      %941 = vmatprep.subr.mxu0 %v792
      %942 = vmatpush1.msra.mxu0 %v791
      %943 = vmatprep.subr.mxu0 %v785
      %944 = vmatpush1.msra.mxu0 %v784
      %945 = vmatprep.subr.mxu0 %v778
      %946 = vmatpush1.msra.mxu0 %v777
      %947 = vmatprep.subr.mxu0 0.0
      %948 = vmatpush2.msra.mxu0 0.0
      %949 = vmatprep.subr.mxu0 0.0
      %950 = vmatpush2.msra.mxu0 0.0
      %951 = vmatprep.subr.mxu0 0.0
      %952 = vmatpush2.msra.mxu0 0.0
      %953 = vmatprep.subr.mxu0 0.0
      %954 = vmatpush2.msra.mxu0 0.0
      %955 = vmatprep.subr.mxu0 0.0
      %956 = vmatpush2.msra.mxu0 0.0
      %957 = vmatprep.subr.mxu0 0.0
      %958 = vmatpush2.msra.mxu0 0.0
      %959 = vmatprep.subr.mxu0 0.0
      %960 = vmatpush2.msra.mxu0 0.0
      %961 = vmatprep.subr.mxu0 0.0
      %962 = vmatpush2.msra.mxu0 0.0
      %963 = vmatprep.subr.mxu0 0.0
      %964 = vmatpush2.msra.mxu0 0.0
      %965 = vmatprep.subr.mxu0 0.0
      %966 = vmatpush2.msra.mxu0 0.0
      %967 = vmatprep.subr.mxu0 0.0
      %968 = vmatpush2.msra.mxu0 0.0
      %969 = vmatprep.subr.mxu0 0.0
      %970 = vmatpush2.msra.mxu0 0.0
      %971 = vmatprep.subr.mxu0 0.0
      %972 = vmatpush2.msra.mxu0 0.0
      %973 = vmatprep.subr.mxu0 0.0
      %974 = vmatpush2.msra.mxu0 0.0
      %975 = vmatprep.subr.mxu0 0.0
      %976 = vmatpush2.msra.mxu0 0.0
      %977 = vmatprep.subr.mxu0 0.0
      %978 = vmatpush2.msra.mxu0 0.0
      %979 = vmatprep.mubr.f32.mxu0 0.0
      %980 = vmatmul.mubr.f32.gmra.mxu0 %v812
      %v981 = vpop.f32.mrf.mxu0
      %v982 = vadd.f32 0.0, %v981
      %v983 = vpop.f32.mrf.mxu0
      %v984 = vadd.f32 0.0, %v983
      %985 = vmatprep.mubr.f32.mxu0 0.0
      %986 = vmatmul.mubr.f32.gmra.mxu0 %v815
      %v987 = vpop.f32.mrf.mxu0
      %v988 = vadd.f32 0.0, %v987
      %v989 = vpop.f32.mrf.mxu0
      %v990 = vadd.f32 0.0, %v989
      %991 = vdwg.mxu0
      %992 = vmatprep.subr.mxu0 0.0
      %993 = vmatpush1.msra.mxu0 0.0
      %994 = vmatprep.subr.mxu0 0.0
      %995 = vmatpush1.msra.mxu0 0.0
      %996 = vmatprep.subr.mxu0 0.0
      %997 = vmatpush1.msra.mxu0 0.0
      %998 = vmatprep.subr.mxu0 0.0
      %999 = vmatpush1.msra.mxu0 0.0
      %1000 = vmatprep.subr.mxu0 0.0
      %1001 = vmatpush1.msra.mxu0 0.0
      %1002 = vmatprep.subr.mxu0 0.0
      %1003 = vmatpush1.msra.mxu0 0.0
      %1004 = vmatprep.subr.mxu0 0.0
      %1005 = vmatpush1.msra.mxu0 0.0
      %1006 = vmatprep.subr.mxu0 0.0
      %1007 = vmatpush1.msra.mxu0 0.0
      %1008 = vmatprep.subr.mxu0 0.0
      %1009 = vmatpush1.msra.mxu0 0.0
      %1010 = vmatprep.subr.mxu0 0.0
      %1011 = vmatpush1.msra.mxu0 0.0
      %1012 = vmatprep.subr.mxu0 0.0
      %1013 = vmatpush1.msra.mxu0 0.0
      %1014 = vmatprep.subr.mxu0 %v833
      %1015 = vmatpush1.msra.mxu0 %v830
      %1016 = vmatprep.subr.mxu0 %v801
      %1017 = vmatpush1.msra.mxu0 %v800
      %1018 = vmatprep.subr.mxu0 %v794
      %1019 = vmatpush1.msra.mxu0 %v793
      %1020 = vmatprep.subr.mxu0 %v787
      %1021 = vmatpush1.msra.mxu0 %v786
      %1022 = vmatprep.subr.mxu0 %v780
      %1023 = vmatpush1.msra.mxu0 %v779
      %1024 = vmatprep.subr.mxu0 0.0
      %1025 = vmatpush2.msra.mxu0 0.0
      %1026 = vmatprep.subr.mxu0 0.0
      %1027 = vmatpush2.msra.mxu0 0.0
      %1028 = vmatprep.subr.mxu0 0.0
      %1029 = vmatpush2.msra.mxu0 0.0
      %1030 = vmatprep.subr.mxu0 0.0
      %1031 = vmatpush2.msra.mxu0 0.0
      %1032 = vmatprep.subr.mxu0 0.0
      %1033 = vmatpush2.msra.mxu0 0.0
      %1034 = vmatprep.subr.mxu0 0.0
      %1035 = vmatpush2.msra.mxu0 0.0
      %1036 = vmatprep.subr.mxu0 0.0
      %1037 = vmatpush2.msra.mxu0 0.0
      %1038 = vmatprep.subr.mxu0 0.0
      %1039 = vmatpush2.msra.mxu0 0.0
      %1040 = vmatprep.subr.mxu0 0.0
      %1041 = vmatpush2.msra.mxu0 0.0
      %1042 = vmatprep.subr.mxu0 0.0
      %1043 = vmatpush2.msra.mxu0 0.0
      %1044 = vmatprep.subr.mxu0 0.0
      %1045 = vmatpush2.msra.mxu0 0.0
      %1046 = vmatprep.subr.mxu0 0.0
      %1047 = vmatpush2.msra.mxu0 0.0
      %1048 = vmatprep.subr.mxu0 0.0
      %1049 = vmatpush2.msra.mxu0 0.0
      %1050 = vmatprep.subr.mxu0 0.0
      %1051 = vmatpush2.msra.mxu0 0.0
      %1052 = vmatprep.subr.mxu0 0.0
      %1053 = vmatpush2.msra.mxu0 0.0
      %1054 = vmatprep.subr.mxu0 0.0
      %1055 = vmatpush2.msra.mxu0 0.0
      %1056 = vmatprep.mubr.f32.mxu0 0.0
      %1057 = vmatmul.mubr.f32.gmra.mxu0 %v812
      %v1058 = vpop.f32.mrf.mxu0
      %v1059 = vadd.f32 0.0, %v1058
      %v1060 = vpop.f32.mrf.mxu0
      %v1061 = vadd.f32 0.0, %v1060
      %1062 = vmatprep.mubr.f32.mxu0 0.0
      %1063 = vmatmul.mubr.f32.gmra.mxu0 %v815
      %v1064 = vpop.f32.mrf.mxu0
      %v1065 = vadd.f32 0.0, %v1064
      %v1066 = vpop.f32.mrf.mxu0
      %v1067 = vadd.f32 0.0, %v1066
      %1068 = vdwg.mxu0
      %1069 = vmatprep.subr.mxu0 0.0
      %1070 = vmatpush1.msra.mxu0 0.0
      %1071 = vmatprep.subr.mxu0 0.0
      %1072 = vmatpush1.msra.mxu0 0.0
      %1073 = vmatprep.subr.mxu0 0.0
      %1074 = vmatpush1.msra.mxu0 0.0
      %1075 = vmatprep.subr.mxu0 0.0
      %1076 = vmatpush1.msra.mxu0 0.0
      %1077 = vmatprep.subr.mxu0 0.0
      %1078 = vmatpush1.msra.mxu0 0.0
      %1079 = vmatprep.subr.mxu0 0.0
      %1080 = vmatpush1.msra.mxu0 0.0
      %1081 = vmatprep.subr.mxu0 0.0
      %1082 = vmatpush1.msra.mxu0 0.0
      %1083 = vmatprep.subr.mxu0 0.0
      %1084 = vmatpush1.msra.mxu0 0.0
      %1085 = vmatprep.subr.mxu0 0.0
      %1086 = vmatpush1.msra.mxu0 0.0
      %1087 = vmatprep.subr.mxu0 0.0
      %1088 = vmatpush1.msra.mxu0 0.0
      %1089 = vmatprep.subr.mxu0 0.0
      %1090 = vmatpush1.msra.mxu0 0.0
      %1091 = vmatprep.subr.mxu0 0.0
      %1092 = vmatpush1.msra.mxu0 %v836
      %1093 = vmatprep.subr.mxu0 0.0
      %1094 = vmatpush1.msra.mxu0 %v802
      %1095 = vmatprep.subr.mxu0 0.0
      %1096 = vmatpush1.msra.mxu0 %v795
      %1097 = vmatprep.subr.mxu0 0.0
      %1098 = vmatpush1.msra.mxu0 %v788
      %1099 = vmatprep.subr.mxu0 0.0
      %1100 = vmatpush1.msra.mxu0 %v781
      %1101 = vmatprep.subr.mxu0 0.0
      %1102 = vmatpush2.msra.mxu0 0.0
      %1103 = vmatprep.subr.mxu0 0.0
      %1104 = vmatpush2.msra.mxu0 0.0
      %1105 = vmatprep.subr.mxu0 0.0
      %1106 = vmatpush2.msra.mxu0 0.0
      %1107 = vmatprep.subr.mxu0 0.0
      %1108 = vmatpush2.msra.mxu0 0.0
      %1109 = vmatprep.subr.mxu0 0.0
      %1110 = vmatpush2.msra.mxu0 0.0
      %1111 = vmatprep.subr.mxu0 0.0
      %1112 = vmatpush2.msra.mxu0 0.0
      %1113 = vmatprep.subr.mxu0 0.0
      %1114 = vmatpush2.msra.mxu0 0.0
      %1115 = vmatprep.subr.mxu0 0.0
      %1116 = vmatpush2.msra.mxu0 0.0
      %1117 = vmatprep.subr.mxu0 0.0
      %1118 = vmatpush2.msra.mxu0 0.0
      %1119 = vmatprep.subr.mxu0 0.0
      %1120 = vmatpush2.msra.mxu0 0.0
      %1121 = vmatprep.subr.mxu0 0.0
      %1122 = vmatpush2.msra.mxu0 0.0
      %1123 = vmatprep.subr.mxu0 0.0
      %1124 = vmatpush2.msra.mxu0 0.0
      %1125 = vmatprep.subr.mxu0 0.0
      %1126 = vmatpush2.msra.mxu0 0.0
      %1127 = vmatprep.subr.mxu0 0.0
      %1128 = vmatpush2.msra.mxu0 0.0
      %1129 = vmatprep.subr.mxu0 0.0
      %1130 = vmatpush2.msra.mxu0 0.0
      %1131 = vmatprep.subr.mxu0 0.0
      %1132 = vmatpush2.msra.mxu0 0.0
      %1133 = vmatprep.mubr.f32.mxu0 0.0
      %1134 = vmatmul.mubr.f32.gmra.mxu0 %v812
      %v1135 = vpop.f32.mrf.mxu0
      %v1136 = vadd.f32 0.0, %v1135
      %v1137 = vpop.f32.mrf.mxu0
      %1138 = vmatprep.mubr.f32.mxu0 0.0
      %1139 = vmatmul.mubr.f32.gmra.mxu0 %v815
      %v1140 = vpop.f32.mrf.mxu0
      %v1141 = vadd.f32 0.0, %v1140
      %v1142 = vpop.f32.mrf.mxu0
      %1143 = vdwg.mxu0
      %1145 = vset.pattern.permute.xlu0 0
      %1146 = vperm.xlu0 %1145, %v320
      %v1147 = vpop.permute.xlu0 %1146
      %v1149 = vadd.f32 %v905, %v1147
      %v1150 = vadd.f32 %v907, %v1147
      %v1151 = vadd.f32 %v982, %v1147
      %v1152 = vadd.f32 %v984, %v1147
      %v1153 = vadd.f32 %v1059, %v1147
      %v1154 = vadd.f32 %v1061, %v1147
      %v1155 = vadd.f32 %v1136, %v1147
      %vm1156 = vcmp.ge.f32.partialorder %v1149, 0.0
      %vm1157 = vcmp.ge.f32.partialorder %v1150, 0.0
      %vm1158 = vcmp.ge.f32.partialorder %v1151, 0.0
      %vm1159 = vcmp.ge.f32.partialorder %v1152, 0.0
      %vm1160 = vcmp.ge.f32.partialorder %v1153, 0.0
      %vm1161 = vcmp.ge.f32.partialorder %v1154, 0.0
      %vm1162 = vcmp.ge.f32.partialorder %v1155, 0.0
      %1164 = vset.pattern.permute.xlu0 0
      %1165 = vperm.xlu0 %1164, %v321
      %v1166 = vpop.permute.xlu0 %1165
      %v1168 = vmul.f32 %v1166, %v1149
      %v1169 = vmul.f32 %v1166, %v1150
      %v1170 = vmul.f32 %v1166, %v1151
      %v1171 = vmul.f32 %v1166, %v1152
      %v1172 = vmul.f32 %v1166, %v1153
      %v1173 = vmul.f32 %v1166, %v1154
      %v1174 = vmul.f32 %v1166, %v1155
      %v1175 = vsel %vm1156, %v1149, %v1168
      %v1176 = vsel %vm1157, %v1150, %v1169
      %v1177 = vsel %vm1158, %v1151, %v1170
      %v1178 = vsel %vm1159, %v1152, %v1171
      %v1179 = vsel %vm1160, %v1153, %v1172
      %v1180 = vsel %vm1161, %v1154, %v1173
      %v1181 = vsel %vm1162, %v1155, %v1174
      %1183 = vset.pattern.permute.xlu0 0
      %1184 = vperm.xlu0 %1183, %v322
      %v1185 = vpop.permute.xlu0 %1184
      %v1187 = vadd.f32 %v911, %v1185
      %v1188 = vadd.f32 %v913, %v1185
      %v1189 = vadd.f32 %v988, %v1185
      %v1190 = vadd.f32 %v990, %v1185
      %v1191 = vadd.f32 %v1065, %v1185
      %v1192 = vadd.f32 %v1067, %v1185
      %v1193 = vadd.f32 %v1141, %v1185
      %v1194 = vadd.f32 %v1175, %v1187
      %v1195 = vadd.f32 %v1176, %v1188
      %v1196 = vadd.f32 %v1177, %v1189
      %v1197 = vadd.f32 %v1178, %v1190
      %v1198 = vadd.f32 %v1179, %v1191
      %v1199 = vadd.f32 %v1180, %v1192
      %v1200 = vadd.f32 %v1181, %v1193
      %v1201 = vmax.f32 %v1194, 0.0
      %v1202 = vmax.f32 %v1195, 0.0
      %v1203 = vmax.f32 %v1196, 0.0
      %v1204 = vmax.f32 %v1197, 0.0
      %v1205 = vmax.f32 %v1198, 0.0
      %v1206 = vmax.f32 %v1199, 0.0
      %v1207 = vmax.f32 %v1200, 0.0
      %v1208 = vld [vmem:[#allocation2] sm:$0xff]
      %v1209 = vld [vmem:[#allocation2 + $0x8] sm:$0xff]
      %v1210 = vld [vmem:[#allocation2 + $0x10] sm:$0xff]
      %v1211 = vld [vmem:[#allocation2 + $0x18] sm:$0xff]
      %1213 = vset.pattern.permute.xlu0 0
      %1214 = vperm.xlu0 %1213, %v324
      %v1215 = vpop.permute.xlu0 %1214
      %vm1217 = vcmask 64512
      %v1219 = vsel %vm1217, %v323, 0
      %1221 = vmatprep.subr.mxu0 0.0
      %1222 = vmatpush1.msra.mxu0 0.0
      %1223 = vmatprep.subr.mxu0 0.0
      %1224 = vmatpush1.msra.mxu0 0.0
      %1225 = vmatprep.subr.mxu0 0.0
      %1226 = vmatpush1.msra.mxu0 0.0
      %1227 = vmatprep.subr.mxu0 0.0
      %1228 = vmatpush1.msra.mxu0 0.0
      %1229 = vmatprep.subr.mxu0 0.0
      %1230 = vmatpush1.msra.mxu0 0.0
      %1231 = vmatprep.subr.mxu0 0.0
      %1232 = vmatpush1.msra.mxu0 0.0
      %1233 = vmatprep.subr.mxu0 0.0
      %1234 = vmatpush1.msra.mxu0 0.0
      %1235 = vmatprep.subr.mxu0 0.0
      %1236 = vmatpush1.msra.mxu0 0.0
      %1237 = vmatprep.subr.mxu0 0.0
      %1238 = vmatpush1.msra.mxu0 0.0
      %1239 = vmatprep.subr.mxu0 0.0
      %1240 = vmatpush1.msra.mxu0 0.0
      %1241 = vmatprep.subr.mxu0 0.0
      %1242 = vmatpush1.msra.mxu0 0.0
      %1243 = vmatprep.subr.mxu0 0.0
      %1244 = vmatpush1.msra.mxu0 0.0
      %1245 = vmatprep.subr.mxu0 0.0
      %1246 = vmatpush1.msra.mxu0 0.0
      %1247 = vmatprep.subr.mxu0 0.0
      %1248 = vmatpush1.msra.mxu0 0.0
      %1249 = vmatprep.subr.mxu0 0.0
      %1250 = vmatpush1.msra.mxu0 0.0
      %1251 = vmatprep.subr.mxu0 %v1202
      %1252 = vmatpush1.msra.mxu0 %v1201
      %1253 = vmatprep.subr.mxu0 0.0
      %1254 = vmatpush2.msra.mxu0 0.0
      %1255 = vmatprep.subr.mxu0 0.0
      %1256 = vmatpush2.msra.mxu0 0.0
      %1257 = vmatprep.subr.mxu0 0.0
      %1258 = vmatpush2.msra.mxu0 0.0
      %1259 = vmatprep.subr.mxu0 0.0
      %1260 = vmatpush2.msra.mxu0 0.0
      %1261 = vmatprep.subr.mxu0 0.0
      %1262 = vmatpush2.msra.mxu0 0.0
      %1263 = vmatprep.subr.mxu0 0.0
      %1264 = vmatpush2.msra.mxu0 0.0
      %1265 = vmatprep.subr.mxu0 0.0
      %1266 = vmatpush2.msra.mxu0 0.0
      %1267 = vmatprep.subr.mxu0 0.0
      %1268 = vmatpush2.msra.mxu0 0.0
      %1269 = vmatprep.subr.mxu0 0.0
      %1270 = vmatpush2.msra.mxu0 0.0
      %1271 = vmatprep.subr.mxu0 0.0
      %1272 = vmatpush2.msra.mxu0 0.0
      %1273 = vmatprep.subr.mxu0 0.0
      %1274 = vmatpush2.msra.mxu0 0.0
      %1275 = vmatprep.subr.mxu0 0.0
      %1276 = vmatpush2.msra.mxu0 0.0
      %1277 = vmatprep.subr.mxu0 0.0
      %1278 = vmatpush2.msra.mxu0 0.0
      %1279 = vmatprep.subr.mxu0 0.0
      %1280 = vmatpush2.msra.mxu0 0.0
      %1281 = vmatprep.subr.mxu0 0.0
      %1282 = vmatpush2.msra.mxu0 0.0
      %1283 = vmatprep.subr.mxu0 0.0
      %1284 = vmatpush2.msra.mxu0 0.0
      %1285 = vmatprep.mubr.f32.mxu0 0.0
      %1286 = vmatmul.mubr.f32.gmra.mxu0 %v1219
      %v1287 = vpop.f32.mrf.mxu0
      %v1288 = vadd.f32 %v1215, %v1287
      %v1289 = vpop.f32.mrf.mxu0
      %v1290 = vadd.f32 %v1215, %v1289
      %1291 = vdwg.mxu0
      %1292 = vmatprep.subr.mxu0 0.0
      %1293 = vmatpush1.msra.mxu0 0.0
      %1294 = vmatprep.subr.mxu0 0.0
      %1295 = vmatpush1.msra.mxu0 0.0
      %1296 = vmatprep.subr.mxu0 0.0
      %1297 = vmatpush1.msra.mxu0 0.0
      %1298 = vmatprep.subr.mxu0 0.0
      %1299 = vmatpush1.msra.mxu0 0.0
      %1300 = vmatprep.subr.mxu0 0.0
      %1301 = vmatpush1.msra.mxu0 0.0
      %1302 = vmatprep.subr.mxu0 0.0
      %1303 = vmatpush1.msra.mxu0 0.0
      %1304 = vmatprep.subr.mxu0 0.0
      %1305 = vmatpush1.msra.mxu0 0.0
      %1306 = vmatprep.subr.mxu0 0.0
      %1307 = vmatpush1.msra.mxu0 0.0
      %1308 = vmatprep.subr.mxu0 0.0
      %1309 = vmatpush1.msra.mxu0 0.0
      %1310 = vmatprep.subr.mxu0 0.0
      %1311 = vmatpush1.msra.mxu0 0.0
      %1312 = vmatprep.subr.mxu0 0.0
      %1313 = vmatpush1.msra.mxu0 0.0
      %1314 = vmatprep.subr.mxu0 0.0
      %1315 = vmatpush1.msra.mxu0 0.0
      %1316 = vmatprep.subr.mxu0 0.0
      %1317 = vmatpush1.msra.mxu0 0.0
      %1318 = vmatprep.subr.mxu0 0.0
      %1319 = vmatpush1.msra.mxu0 0.0
      %1320 = vmatprep.subr.mxu0 0.0
      %1321 = vmatpush1.msra.mxu0 0.0
      %1322 = vmatprep.subr.mxu0 %v1204
      %1323 = vmatpush1.msra.mxu0 %v1203
      %1324 = vmatprep.subr.mxu0 0.0
      %1325 = vmatpush2.msra.mxu0 0.0
      %1326 = vmatprep.subr.mxu0 0.0
      %1327 = vmatpush2.msra.mxu0 0.0
      %1328 = vmatprep.subr.mxu0 0.0
      %1329 = vmatpush2.msra.mxu0 0.0
      %1330 = vmatprep.subr.mxu0 0.0
      %1331 = vmatpush2.msra.mxu0 0.0
      %1332 = vmatprep.subr.mxu0 0.0
      %1333 = vmatpush2.msra.mxu0 0.0
      %1334 = vmatprep.subr.mxu0 0.0
      %1335 = vmatpush2.msra.mxu0 0.0
      %1336 = vmatprep.subr.mxu0 0.0
      %1337 = vmatpush2.msra.mxu0 0.0
      %1338 = vmatprep.subr.mxu0 0.0
      %1339 = vmatpush2.msra.mxu0 0.0
      %1340 = vmatprep.subr.mxu0 0.0
      %1341 = vmatpush2.msra.mxu0 0.0
      %1342 = vmatprep.subr.mxu0 0.0
      %1343 = vmatpush2.msra.mxu0 0.0
      %1344 = vmatprep.subr.mxu0 0.0
      %1345 = vmatpush2.msra.mxu0 0.0
      %1346 = vmatprep.subr.mxu0 0.0
      %1347 = vmatpush2.msra.mxu0 0.0
      %1348 = vmatprep.subr.mxu0 0.0
      %1349 = vmatpush2.msra.mxu0 0.0
      %1350 = vmatprep.subr.mxu0 0.0
      %1351 = vmatpush2.msra.mxu0 0.0
      %1352 = vmatprep.subr.mxu0 0.0
      %1353 = vmatpush2.msra.mxu0 0.0
      %1354 = vmatprep.subr.mxu0 0.0
      %1355 = vmatpush2.msra.mxu0 0.0
      %1356 = vmatprep.mubr.f32.mxu0 0.0
      %1357 = vmatmul.mubr.f32.gmra.mxu0 %v1219
      %v1358 = vpop.f32.mrf.mxu0
      %v1359 = vadd.f32 %v1215, %v1358
      %v1360 = vpop.f32.mrf.mxu0
      %v1361 = vadd.f32 %v1215, %v1360
      %1362 = vdwg.mxu0
      %1363 = vmatprep.subr.mxu0 0.0
      %1364 = vmatpush1.msra.mxu0 0.0
      %1365 = vmatprep.subr.mxu0 0.0
      %1366 = vmatpush1.msra.mxu0 0.0
      %1367 = vmatprep.subr.mxu0 0.0
      %1368 = vmatpush1.msra.mxu0 0.0
      %1369 = vmatprep.subr.mxu0 0.0
      %1370 = vmatpush1.msra.mxu0 0.0
      %1371 = vmatprep.subr.mxu0 0.0
      %1372 = vmatpush1.msra.mxu0 0.0
      %1373 = vmatprep.subr.mxu0 0.0
      %1374 = vmatpush1.msra.mxu0 0.0
      %1375 = vmatprep.subr.mxu0 0.0
      %1376 = vmatpush1.msra.mxu0 0.0
      %1377 = vmatprep.subr.mxu0 0.0
      %1378 = vmatpush1.msra.mxu0 0.0
      %1379 = vmatprep.subr.mxu0 0.0
      %1380 = vmatpush1.msra.mxu0 0.0
      %1381 = vmatprep.subr.mxu0 0.0
      %1382 = vmatpush1.msra.mxu0 0.0
      %1383 = vmatprep.subr.mxu0 0.0
      %1384 = vmatpush1.msra.mxu0 0.0
      %1385 = vmatprep.subr.mxu0 0.0
      %1386 = vmatpush1.msra.mxu0 0.0
      %1387 = vmatprep.subr.mxu0 0.0
      %1388 = vmatpush1.msra.mxu0 0.0
      %1389 = vmatprep.subr.mxu0 0.0
      %1390 = vmatpush1.msra.mxu0 0.0
      %1391 = vmatprep.subr.mxu0 0.0
      %1392 = vmatpush1.msra.mxu0 0.0
      %1393 = vmatprep.subr.mxu0 %v1206
      %1394 = vmatpush1.msra.mxu0 %v1205
      %1395 = vmatprep.subr.mxu0 0.0
      %1396 = vmatpush2.msra.mxu0 0.0
      %1397 = vmatprep.subr.mxu0 0.0
      %1398 = vmatpush2.msra.mxu0 0.0
      %1399 = vmatprep.subr.mxu0 0.0
      %1400 = vmatpush2.msra.mxu0 0.0
      %1401 = vmatprep.subr.mxu0 0.0
      %1402 = vmatpush2.msra.mxu0 0.0
      %1403 = vmatprep.subr.mxu0 0.0
      %1404 = vmatpush2.msra.mxu0 0.0
      %1405 = vmatprep.subr.mxu0 0.0
      %1406 = vmatpush2.msra.mxu0 0.0
      %1407 = vmatprep.subr.mxu0 0.0
      %1408 = vmatpush2.msra.mxu0 0.0
      %1409 = vmatprep.subr.mxu0 0.0
      %1410 = vmatpush2.msra.mxu0 0.0
      %1411 = vmatprep.subr.mxu0 0.0
      %1412 = vmatpush2.msra.mxu0 0.0
      %1413 = vmatprep.subr.mxu0 0.0
      %1414 = vmatpush2.msra.mxu0 0.0
      %1415 = vmatprep.subr.mxu0 0.0
      %1416 = vmatpush2.msra.mxu0 0.0
      %1417 = vmatprep.subr.mxu0 0.0
      %1418 = vmatpush2.msra.mxu0 0.0
      %1419 = vmatprep.subr.mxu0 0.0
      %1420 = vmatpush2.msra.mxu0 0.0
      %1421 = vmatprep.subr.mxu0 0.0
      %1422 = vmatpush2.msra.mxu0 0.0
      %1423 = vmatprep.subr.mxu0 0.0
      %1424 = vmatpush2.msra.mxu0 0.0
      %1425 = vmatprep.subr.mxu0 0.0
      %1426 = vmatpush2.msra.mxu0 0.0
      %1427 = vmatprep.mubr.f32.mxu0 0.0
      %1428 = vmatmul.mubr.f32.gmra.mxu0 %v1219
      %v1429 = vpop.f32.mrf.mxu0
      %v1430 = vadd.f32 %v1215, %v1429
      %v1431 = vpop.f32.mrf.mxu0
      %v1432 = vadd.f32 %v1215, %v1431
      %1433 = vdwg.mxu0
      %1434 = vmatprep.subr.mxu0 0.0
      %1435 = vmatpush1.msra.mxu0 0.0
      %1436 = vmatprep.subr.mxu0 0.0
      %1437 = vmatpush1.msra.mxu0 0.0
      %1438 = vmatprep.subr.mxu0 0.0
      %1439 = vmatpush1.msra.mxu0 0.0
      %1440 = vmatprep.subr.mxu0 0.0
      %1441 = vmatpush1.msra.mxu0 0.0
      %1442 = vmatprep.subr.mxu0 0.0
      %1443 = vmatpush1.msra.mxu0 0.0
      %1444 = vmatprep.subr.mxu0 0.0
      %1445 = vmatpush1.msra.mxu0 0.0
      %1446 = vmatprep.subr.mxu0 0.0
      %1447 = vmatpush1.msra.mxu0 0.0
      %1448 = vmatprep.subr.mxu0 0.0
      %1449 = vmatpush1.msra.mxu0 0.0
      %1450 = vmatprep.subr.mxu0 0.0
      %1451 = vmatpush1.msra.mxu0 0.0
      %1452 = vmatprep.subr.mxu0 0.0
      %1453 = vmatpush1.msra.mxu0 0.0
      %1454 = vmatprep.subr.mxu0 0.0
      %1455 = vmatpush1.msra.mxu0 0.0
      %1456 = vmatprep.subr.mxu0 0.0
      %1457 = vmatpush1.msra.mxu0 0.0
      %1458 = vmatprep.subr.mxu0 0.0
      %1459 = vmatpush1.msra.mxu0 0.0
      %1460 = vmatprep.subr.mxu0 0.0
      %1461 = vmatpush1.msra.mxu0 0.0
      %1462 = vmatprep.subr.mxu0 0.0
      %1463 = vmatpush1.msra.mxu0 0.0
      %1464 = vmatprep.subr.mxu0 0.0
      %1465 = vmatpush1.msra.mxu0 %v1207
      %1466 = vmatprep.subr.mxu0 0.0
      %1467 = vmatpush2.msra.mxu0 0.0
      %1468 = vmatprep.subr.mxu0 0.0
      %1469 = vmatpush2.msra.mxu0 0.0
      %1470 = vmatprep.subr.mxu0 0.0
      %1471 = vmatpush2.msra.mxu0 0.0
      %1472 = vmatprep.subr.mxu0 0.0
      %1473 = vmatpush2.msra.mxu0 0.0
      %1474 = vmatprep.subr.mxu0 0.0
      %1475 = vmatpush2.msra.mxu0 0.0
      %1476 = vmatprep.subr.mxu0 0.0
      %1477 = vmatpush2.msra.mxu0 0.0
      %1478 = vmatprep.subr.mxu0 0.0
      %1479 = vmatpush2.msra.mxu0 0.0
      %1480 = vmatprep.subr.mxu0 0.0
      %1481 = vmatpush2.msra.mxu0 0.0
      %1482 = vmatprep.subr.mxu0 0.0
      %1483 = vmatpush2.msra.mxu0 0.0
      %1484 = vmatprep.subr.mxu0 0.0
      %1485 = vmatpush2.msra.mxu0 0.0
      %1486 = vmatprep.subr.mxu0 0.0
      %1487 = vmatpush2.msra.mxu0 0.0
      %1488 = vmatprep.subr.mxu0 0.0
      %1489 = vmatpush2.msra.mxu0 0.0
      %1490 = vmatprep.subr.mxu0 0.0
      %1491 = vmatpush2.msra.mxu0 0.0
      %1492 = vmatprep.subr.mxu0 0.0
      %1493 = vmatpush2.msra.mxu0 0.0
      %1494 = vmatprep.subr.mxu0 0.0
      %1495 = vmatpush2.msra.mxu0 0.0
      %1496 = vmatprep.subr.mxu0 0.0
      %1497 = vmatpush2.msra.mxu0 0.0
      %1498 = vmatprep.mubr.f32.mxu0 0.0
      %1499 = vmatmul.mubr.f32.gmra.mxu0 %v1219
      %v1500 = vpop.f32.mrf.mxu0
      %v1501 = vadd.f32 %v1215, %v1500
      %v1502 = vpop.f32.mrf.mxu0
      %1503 = vdwg.mxu0
      %v1504 = vxor.u32 %v1288, 2147483648
      %v1505 = vxor.u32 %v1290, 2147483648
      %v1506 = vxor.u32 %v1359, 2147483648
      %v1507 = vxor.u32 %v1361, 2147483648
      %v1508 = vxor.u32 %v1430, 2147483648
      %v1509 = vxor.u32 %v1432, 2147483648
      %v1510 = vxor.u32 %v1501, 2147483648
      %v1511 = vmul.f32 %v1504, 1.442695
      %v1512 = vpow.pop %v1511
      %v1513 = vmul.f32 %v1505, 1.442695
      %v1514 = vpow.pop %v1513
      %v1515 = vmul.f32 %v1506, 1.442695
      %v1516 = vpow.pop %v1515
      %v1517 = vmul.f32 %v1507, 1.442695
      %v1518 = vpow.pop %v1517
      %v1519 = vmul.f32 %v1508, 1.442695
      %v1520 = vpow.pop %v1519
      %v1521 = vmul.f32 %v1509, 1.442695
      %v1522 = vpow.pop %v1521
      %v1523 = vmul.f32 %v1510, 1.442695
      %v1524 = vpow.pop %v1523
      %v1525 = vadd.f32 %v1512, 1.0
      %v1526 = vadd.f32 %v1514, 1.0
      %v1527 = vadd.f32 %v1516, 1.0
      %v1528 = vadd.f32 %v1518, 1.0
      %v1529 = vadd.f32 %v1520, 1.0
      %v1530 = vadd.f32 %v1522, 1.0
      %v1531 = vadd.f32 %v1524, 1.0
      %v1532 = vrcp.pop %v1525
      %v1533 = vmul.f32 1.0, %v1532
      %v1534 = vrcp.pop %v1526
      %v1535 = vmul.f32 1.0, %v1534
      %v1536 = vrcp.pop %v1527
      %v1537 = vmul.f32 1.0, %v1536
      %v1538 = vrcp.pop %v1528
      %v1539 = vmul.f32 1.0, %v1538
      %v1540 = vrcp.pop %v1529
      %v1541 = vmul.f32 1.0, %v1540
      %v1542 = vrcp.pop %v1530
      %v1543 = vmul.f32 1.0, %v1542
      %v1544 = vrcp.pop %v1531
      %v1545 = vmul.f32 1.0, %v1544
      %v1546 = vadd.f32 %v1533, 1.0
      %v1547 = vadd.f32 %v1535, 1.0
      %v1548 = vadd.f32 %v1537, 1.0
      %v1549 = vadd.f32 %v1539, 1.0
      %v1550 = vadd.f32 %v1541, 1.0
      %v1551 = vadd.f32 %v1543, 1.0
      %v1552 = vadd.f32 %v1545, 1.0
      %v1557 = vcombine.high %v1208, %v1208
      %v1558 = vcombine.high %v1209, %v1209
      %v1559 = vcombine.high %v1210, %v1210
      %v1560 = vcombine.high %v1211, %v1211
      %1561 = vrot.lane.b32.xlu0 %v1208, 104
      %v1562 = vpop.permute.xlu0 %1561
      %1563 = vrot.lane.b32.xlu0 %v1557, 104
      %v1564 = vpop.permute.xlu0 %1563
      %1565 = vrot.lane.b32.xlu0 %v1209, 104
      %v1566 = vpop.permute.xlu0 %1565
      %1567 = vrot.lane.b32.xlu0 %v1558, 104
      %v1568 = vpop.permute.xlu0 %1567
      %1569 = vrot.lane.b32.xlu0 %v1210, 104
      %v1570 = vpop.permute.xlu0 %1569
      %1571 = vrot.lane.b32.xlu0 %v1559, 104
      %v1572 = vpop.permute.xlu0 %1571
      %1573 = vrot.lane.b32.xlu0 %v1211, 104
      %v1574 = vpop.permute.xlu0 %1573
      %1575 = vrot.lane.b32.xlu0 %v1560, 104
      %v1576 = vpop.permute.xlu0 %1575
      %v1577 = vsel %vm553, %v1562, %v1564
      %v1578 = vsel %vm553, %v1564, %v1566
      %v1579 = vsel %vm553, %v1566, %v1568
      %v1580 = vsel %vm553, %v1568, %v1570
      %v1581 = vsel %vm553, %v1570, %v1572
      %v1582 = vsel %vm553, %v1572, %v1574
      %v1583 = vsel %vm553, %v1574, %v1576
      %v1591 = vmul.f32 %v1546, %v1577
      %v1592 = vmul.f32 %v1547, %v1578
      %v1593 = vmul.f32 %v1548, %v1579
      %v1594 = vmul.f32 %v1549, %v1580
      %v1595 = vmul.f32 %v1550, %v1581
      %v1596 = vmul.f32 %v1551, %v1582
      %v1597 = vmul.f32 %v1552, %v1583
      %1605 = vrot.lane.b32.xlu0 %v1591, 123
      %v1606 = vpop.permute.xlu0 %1605
      %1607 = vrot.lane.b32.xlu0 %v1592, 123
      %v1608 = vpop.permute.xlu0 %1607
      %1609 = vrot.lane.b32.xlu0 %v1593, 123
      %v1610 = vpop.permute.xlu0 %1609
      %1611 = vrot.lane.b32.xlu0 %v1594, 123
      %v1612 = vpop.permute.xlu0 %1611
      %1613 = vrot.lane.b32.xlu0 %v1595, 123
      %v1614 = vpop.permute.xlu0 %1613
      %1615 = vrot.lane.b32.xlu0 %v1596, 123
      %v1616 = vpop.permute.xlu0 %1615
      %1617 = vrot.lane.b32.xlu0 %v1597, 123
      %v1618 = vpop.permute.xlu0 %1617
      %v1619 = vsel %vm353, %v1606, %v1608
      %v1620 = vsel %vm353, %v1608, %v1610
      %v1621 = vsel %vm353, %v1610, %v1612
      %v1622 = vsel %vm353, %v1612, %v1614
      %v1623 = vsel %vm353, %v1614, %v1616
      %v1624 = vsel %vm353, %v1616, %v1618
      %1631 = vst [vmem:[#allocation3] sm:$0xf] %v1619
      %1632 = vst [vmem:[#allocation3 + $0x8] sm:$0xf] %v1620
      %1633 = vst [vmem:[#allocation3 + $0x10] sm:$0xf] %v1621
      %1634 = vst [vmem:[#allocation3 + $0x18] sm:$0xf] %v1622
      %1635 = vst [vmem:[#allocation3 + $0x20] sm:$0xf] %v1623
      %1636 = vst [vmem:[#allocation3 + $0x28] sm:$0xf] %v1624
      %v1637 = vrot.slane %v1591, 4
      %v1638 = vrot.slane %v1592, 4
      %v1639 = vrot.slane %v1593, 4
      %v1640 = vrot.slane %v1594, 4
      %v1641 = vrot.slane %v1595, 4
      %v1642 = vrot.slane %v1596, 4
      %v1643 = vrot.slane %v1597, 4
      %1644 = vrot.lane.b32.xlu0 %v1637, 122
      %v1645 = vpop.permute.xlu0 %1644
      %1646 = vrot.lane.b32.xlu0 %v1638, 122
      %v1647 = vpop.permute.xlu0 %1646
      %1648 = vrot.lane.b32.xlu0 %v1639, 122
      %v1649 = vpop.permute.xlu0 %1648
      %1650 = vrot.lane.b32.xlu0 %v1640, 122
      %v1651 = vpop.permute.xlu0 %1650
      %1652 = vrot.lane.b32.xlu0 %v1641, 122
      %v1653 = vpop.permute.xlu0 %1652
      %1654 = vrot.lane.b32.xlu0 %v1642, 122
      %v1655 = vpop.permute.xlu0 %1654
      %1656 = vrot.lane.b32.xlu0 %v1643, 122
      %v1657 = vpop.permute.xlu0 %1656
      %v1658 = vsel %vm403, %v1645, %v1647
      %v1659 = vsel %vm403, %v1647, %v1649
      %v1660 = vsel %vm403, %v1649, %v1651
      %v1661 = vsel %vm403, %v1651, %v1653
      %v1662 = vsel %vm403, %v1653, %v1655
      %v1663 = vsel %vm403, %v1655, %v1657
      %1670 = vst [vmem:[#allocation3] sm:$0xf0] %v1658
      %1671 = vst [vmem:[#allocation3 + $0x8] sm:$0xf0] %v1659
      %1672 = vst [vmem:[#allocation3 + $0x10] sm:$0xf0] %v1660
      %1673 = vst [vmem:[#allocation3 + $0x18] sm:$0xf0] %v1661
      %1674 = vst [vmem:[#allocation3 + $0x20] sm:$0xf0] %v1662
      %1675 = vst [vmem:[#allocation3 + $0x28] sm:$0xf0] %v1663
      %1676 = vrot.lane.b32.xlu0 %v1591, 121
      %v1677 = vpop.permute.xlu0 %1676
      %1678 = vrot.lane.b32.xlu0 %v1592, 121
      %v1679 = vpop.permute.xlu0 %1678
      %1680 = vrot.lane.b32.xlu0 %v1593, 121
      %v1681 = vpop.permute.xlu0 %1680
      %1682 = vrot.lane.b32.xlu0 %v1594, 121
      %v1683 = vpop.permute.xlu0 %1682
      %1684 = vrot.lane.b32.xlu0 %v1595, 121
      %v1685 = vpop.permute.xlu0 %1684
      %1686 = vrot.lane.b32.xlu0 %v1596, 121
      %v1687 = vpop.permute.xlu0 %1686
      %1688 = vrot.lane.b32.xlu0 %v1597, 121
      %v1689 = vpop.permute.xlu0 %1688
      %v1690 = vsel %vm453, %v1677, %v1679
      %v1691 = vsel %vm453, %v1679, %v1681
      %v1692 = vsel %vm453, %v1681, %v1683
      %v1693 = vsel %vm453, %v1683, %v1685
      %v1694 = vsel %vm453, %v1685, %v1687
      %v1695 = vsel %vm453, %v1687, %v1689
      %1702 = vst [vmem:[#allocation3 + $0x38] sm:$0xf] %v1690
      %1703 = vst [vmem:[#allocation3 + $0x40] sm:$0xf] %v1691
      %1704 = vst [vmem:[#allocation3 + $0x48] sm:$0xf] %v1692
      %1705 = vst [vmem:[#allocation3 + $0x50] sm:$0xf] %v1693
      %1706 = vst [vmem:[#allocation3 + $0x58] sm:$0xf] %v1694
      %1707 = vst [vmem:[#allocation3 + $0x60] sm:$0xf] %v1695
      %1708 = vrot.lane.b32.xlu0 %v1637, 105
      %v1709 = vpop.permute.xlu0 %1708
      %1710 = vrot.lane.b32.xlu0 %v1638, 105
      %v1711 = vpop.permute.xlu0 %1710
      %1712 = vrot.lane.b32.xlu0 %v1639, 105
      %v1713 = vpop.permute.xlu0 %1712
      %1714 = vrot.lane.b32.xlu0 %v1640, 105
      %v1715 = vpop.permute.xlu0 %1714
      %1716 = vrot.lane.b32.xlu0 %v1641, 105
      %v1717 = vpop.permute.xlu0 %1716
      %1718 = vrot.lane.b32.xlu0 %v1642, 105
      %v1719 = vpop.permute.xlu0 %1718
      %1720 = vrot.lane.b32.xlu0 %v1643, 105
      %v1721 = vpop.permute.xlu0 %1720
      %v1722 = vsel %vm503, %v1709, %v1711
      %v1723 = vsel %vm503, %v1711, %v1713
      %v1724 = vsel %vm503, %v1713, %v1715
      %v1725 = vsel %vm503, %v1715, %v1717
      %v1726 = vsel %vm503, %v1717, %v1719
      %v1727 = vsel %vm503, %v1719, %v1721
      %1734 = vst [vmem:[#allocation3 + $0x38] sm:$0xf0] %v1722
      %1735 = vst [vmem:[#allocation3 + $0x40] sm:$0xf0] %v1723
      %1736 = vst [vmem:[#allocation3 + $0x48] sm:$0xf0] %v1724
      %1737 = vst [vmem:[#allocation3 + $0x50] sm:$0xf0] %v1725
      %1738 = vst [vmem:[#allocation3 + $0x58] sm:$0xf0] %v1726
      %1739 = vst [vmem:[#allocation3 + $0x60] sm:$0xf0] %v1727
      %1740 = vrot.lane.b32.xlu0 %v1591, 104
      %v1741 = vpop.permute.xlu0 %1740
      %1742 = vrot.lane.b32.xlu0 %v1592, 104
      %v1743 = vpop.permute.xlu0 %1742
      %1744 = vrot.lane.b32.xlu0 %v1593, 104
      %v1745 = vpop.permute.xlu0 %1744
      %1746 = vrot.lane.b32.xlu0 %v1594, 104
      %v1747 = vpop.permute.xlu0 %1746
      %1748 = vrot.lane.b32.xlu0 %v1595, 104
      %v1749 = vpop.permute.xlu0 %1748
      %1750 = vrot.lane.b32.xlu0 %v1596, 104
      %v1751 = vpop.permute.xlu0 %1750
      %1752 = vrot.lane.b32.xlu0 %v1597, 104
      %v1753 = vpop.permute.xlu0 %1752
      %v1754 = vsel %vm553, %v1741, %v1743
      %v1755 = vsel %vm553, %v1743, %v1745
      %v1756 = vsel %vm553, %v1745, %v1747
      %v1757 = vsel %vm553, %v1747, %v1749
      %v1758 = vsel %vm553, %v1749, %v1751
      %v1759 = vsel %vm553, %v1751, %v1753
      %1766 = vst [vmem:[#allocation3 + $0x70] sm:$0xf] %v1754
      %1767 = vst [vmem:[#allocation3 + $0x78] sm:$0xf] %v1755
      %1768 = vst [vmem:[#allocation3 + $0x80] sm:$0xf] %v1756
      %1769 = vst [vmem:[#allocation3 + $0x88] sm:$0xf] %v1757
      %1770 = vst [vmem:[#allocation3 + $0x90] sm:$0xf] %v1758
      %1771 = vst [vmem:[#allocation3 + $0x98] sm:$0xf] %v1759
      %1772 = vrot.lane.b32.xlu0 %v1637, 103
      %v1773 = vpop.permute.xlu0 %1772
      %1774 = vrot.lane.b32.xlu0 %v1638, 103
      %v1775 = vpop.permute.xlu0 %1774
      %1776 = vrot.lane.b32.xlu0 %v1639, 103
      %v1777 = vpop.permute.xlu0 %1776
      %1778 = vrot.lane.b32.xlu0 %v1640, 103
      %v1779 = vpop.permute.xlu0 %1778
      %1780 = vrot.lane.b32.xlu0 %v1641, 103
      %v1781 = vpop.permute.xlu0 %1780
      %1782 = vrot.lane.b32.xlu0 %v1642, 103
      %v1783 = vpop.permute.xlu0 %1782
      %1784 = vrot.lane.b32.xlu0 %v1643, 103
      %v1785 = vpop.permute.xlu0 %1784
      %v1786 = vsel %vm603, %v1773, %v1775
      %v1787 = vsel %vm603, %v1775, %v1777
      %v1788 = vsel %vm603, %v1777, %v1779
      %v1789 = vsel %vm603, %v1779, %v1781
      %v1790 = vsel %vm603, %v1781, %v1783
      %v1791 = vsel %vm603, %v1783, %v1785
      %1798 = vst [vmem:[#allocation3 + $0x70] sm:$0xf0] %v1786
      %1799 = vst [vmem:[#allocation3 + $0x78] sm:$0xf0] %v1787
      %1800 = vst [vmem:[#allocation3 + $0x80] sm:$0xf0] %v1788
      %1801 = vst [vmem:[#allocation3 + $0x88] sm:$0xf0] %v1789
      %1802 = vst [vmem:[#allocation3 + $0x90] sm:$0xf0] %v1790
      %1803 = vst [vmem:[#allocation3 + $0x98] sm:$0xf0] %v1791
      %1804 = vrot.lane.b32.xlu0 %v1591, 87
      %v1805 = vpop.permute.xlu0 %1804
      %1806 = vrot.lane.b32.xlu0 %v1592, 87
      %v1807 = vpop.permute.xlu0 %1806
      %1808 = vrot.lane.b32.xlu0 %v1593, 87
      %v1809 = vpop.permute.xlu0 %1808
      %1810 = vrot.lane.b32.xlu0 %v1594, 87
      %v1811 = vpop.permute.xlu0 %1810
      %1812 = vrot.lane.b32.xlu0 %v1595, 87
      %v1813 = vpop.permute.xlu0 %1812
      %1814 = vrot.lane.b32.xlu0 %v1596, 87
      %v1815 = vpop.permute.xlu0 %1814
      %1816 = vrot.lane.b32.xlu0 %v1597, 87
      %v1817 = vpop.permute.xlu0 %1816
      %v1818 = vsel %vm653, %v1805, %v1807
      %v1819 = vsel %vm653, %v1807, %v1809
      %v1820 = vsel %vm653, %v1809, %v1811
      %v1821 = vsel %vm653, %v1811, %v1813
      %v1822 = vsel %vm653, %v1813, %v1815
      %v1823 = vsel %vm653, %v1815, %v1817
      %1830 = vst [vmem:[#allocation3 + $0xa8] sm:$0xf] %v1818
      %1831 = vst [vmem:[#allocation3 + $0xb0] sm:$0xf] %v1819
      %1832 = vst [vmem:[#allocation3 + $0xb8] sm:$0xf] %v1820
      %1833 = vst [vmem:[#allocation3 + $0xc0] sm:$0xf] %v1821
      %1834 = vst [vmem:[#allocation3 + $0xc8] sm:$0xf] %v1822
      %1835 = vst [vmem:[#allocation3 + $0xd0] sm:$0xf] %v1823
      %1836 = vrot.lane.b32.xlu0 %v1637, 86
      %v1837 = vpop.permute.xlu0 %1836
      %1838 = vrot.lane.b32.xlu0 %v1638, 86
      %v1839 = vpop.permute.xlu0 %1838
      %1840 = vrot.lane.b32.xlu0 %v1639, 86
      %v1841 = vpop.permute.xlu0 %1840
      %1842 = vrot.lane.b32.xlu0 %v1640, 86
      %v1843 = vpop.permute.xlu0 %1842
      %1844 = vrot.lane.b32.xlu0 %v1641, 86
      %v1845 = vpop.permute.xlu0 %1844
      %1846 = vrot.lane.b32.xlu0 %v1642, 86
      %v1847 = vpop.permute.xlu0 %1846
      %1848 = vrot.lane.b32.xlu0 %v1643, 86
      %v1849 = vpop.permute.xlu0 %1848
      %v1850 = vsel %vm703, %v1837, %v1839
      %v1851 = vsel %vm703, %v1839, %v1841
      %v1852 = vsel %vm703, %v1841, %v1843
      %v1853 = vsel %vm703, %v1843, %v1845
      %v1854 = vsel %vm703, %v1845, %v1847
      %v1855 = vsel %vm703, %v1847, %v1849
      %1862 = vst [vmem:[#allocation3 + $0xa8] sm:$0xf0] %v1850
      %1863 = vst [vmem:[#allocation3 + $0xb0] sm:$0xf0] %v1851
      %1864 = vst [vmem:[#allocation3 + $0xb8] sm:$0xf0] %v1852
      %1865 = vst [vmem:[#allocation3 + $0xc0] sm:$0xf0] %v1853
      %1866 = vst [vmem:[#allocation3 + $0xc8] sm:$0xf0] %v1854
      %1867 = vst [vmem:[#allocation3 + $0xd0] sm:$0xf0] %v1855
      %1868 = vrot.lane.b32.xlu0 %v1591, 85
      %v1869 = vpop.permute.xlu0 %1868
      %1870 = vrot.lane.b32.xlu0 %v1592, 85
      %v1871 = vpop.permute.xlu0 %1870
      %1872 = vrot.lane.b32.xlu0 %v1593, 85
      %v1873 = vpop.permute.xlu0 %1872
      %1874 = vrot.lane.b32.xlu0 %v1594, 85
      %v1875 = vpop.permute.xlu0 %1874
      %1876 = vrot.lane.b32.xlu0 %v1595, 85
      %v1877 = vpop.permute.xlu0 %1876
      %1878 = vrot.lane.b32.xlu0 %v1596, 85
      %v1879 = vpop.permute.xlu0 %1878
      %1880 = vrot.lane.b32.xlu0 %v1597, 85
      %v1881 = vpop.permute.xlu0 %1880
      %v1882 = vsel %vm753, %v1869, %v1871
      %v1883 = vsel %vm753, %v1871, %v1873
      %v1884 = vsel %vm753, %v1873, %v1875
      %v1885 = vsel %vm753, %v1875, %v1877
      %v1886 = vsel %vm753, %v1877, %v1879
      %v1887 = vsel %vm753, %v1879, %v1881
      %1894 = vst [vmem:[#allocation3 + $0xe0] sm:$0xf] %v1882
      %1895 = vst [vmem:[#allocation3 + $0xe8] sm:$0xf] %v1883
      %1896 = vst [vmem:[#allocation3 + $0xf0] sm:$0xf] %v1884
      %1897 = vst [vmem:[#allocation3 + $0xf8] sm:$0xf] %v1885
      %1898 = vst [vmem:[#allocation3 + $0x100] sm:$0xf] %v1886
      %1899 = vst [vmem:[#allocation3 + $0x108] sm:$0xf] %v1887
      %v1900 = vld [vmem:[#allocation3] sm:$0xff]
      %v1901 = vld [vmem:[#allocation3 + $0x8] sm:$0xff]
      %v1902 = vld [vmem:[#allocation3 + $0x10] sm:$0xff]
      %v1903 = vld [vmem:[#allocation3 + $0x18] sm:$0xff]
      %v1904 = vld [vmem:[#allocation3 + $0x20] sm:$0xff]
      %v1905 = vld [vmem:[#allocation3 + $0x28] sm:$0xff]
      %v1906 = vld [vmem:[#allocation3 + $0x38] sm:$0xff]
      %v1907 = vld [vmem:[#allocation3 + $0x40] sm:$0xff]
      %v1908 = vld [vmem:[#allocation3 + $0x48] sm:$0xff]
      %v1909 = vld [vmem:[#allocation3 + $0x50] sm:$0xff]
      %v1910 = vld [vmem:[#allocation3 + $0x58] sm:$0xff]
      %v1911 = vld [vmem:[#allocation3 + $0x60] sm:$0xff]
      %v1912 = vld [vmem:[#allocation3 + $0x70] sm:$0xff]
      %v1913 = vld [vmem:[#allocation3 + $0x78] sm:$0xff]
      %v1914 = vld [vmem:[#allocation3 + $0x80] sm:$0xff]
      %v1915 = vld [vmem:[#allocation3 + $0x88] sm:$0xff]
      %v1916 = vld [vmem:[#allocation3 + $0x90] sm:$0xff]
      %v1917 = vld [vmem:[#allocation3 + $0x98] sm:$0xff]
      %v1918 = vld [vmem:[#allocation3 + $0xa8] sm:$0xff]
      %v1919 = vld [vmem:[#allocation3 + $0xb0] sm:$0xff]
      %v1920 = vld [vmem:[#allocation3 + $0xb8] sm:$0xff]
      %v1921 = vld [vmem:[#allocation3 + $0xc0] sm:$0xff]
      %v1922 = vld [vmem:[#allocation3 + $0xc8] sm:$0xff]
      %v1923 = vld [vmem:[#allocation3 + $0xd0] sm:$0xff]
      %v1924 = vld [vmem:[#allocation3 + $0xe0] sm:$0xf]
      %v1925 = vld [vmem:[#allocation3 + $0xe8] sm:$0xf]
      %v1926 = vld [vmem:[#allocation3 + $0xf0] sm:$0xf]
      %v1927 = vld [vmem:[#allocation3 + $0xf8] sm:$0xf]
      %v1928 = vld [vmem:[#allocation3 + $0x100] sm:$0xf]
      %v1929 = vld [vmem:[#allocation3 + $0x108] sm:$0xf]
      %v1931 = vsel %vm303, %v1924, 0
      %v1934 = vsel %vm303, %v1925, 0
      %v1937 = vsel %vm303, %v1926, 0
      %v1940 = vsel %vm303, %v1927, 0
      %v1943 = vsel %vm303, %v1928, 0
      %v1946 = vsel %vm303, %v1929, 0
      %1948 = vmatprep.subr.mxu0 0.0
      %1949 = vmatpush1.msra.mxu0 0.0
      %1950 = vmatprep.subr.mxu0 0.0
      %1951 = vmatpush1.msra.mxu0 0.0
      %1952 = vmatprep.subr.mxu0 0.0
      %1953 = vmatpush1.msra.mxu0 0.0
      %1954 = vmatprep.subr.mxu0 0.0
      %1955 = vmatpush1.msra.mxu0 0.0
      %1956 = vmatprep.subr.mxu0 0.0
      %1957 = vmatpush1.msra.mxu0 0.0
      %1958 = vmatprep.subr.mxu0 0.0
      %1959 = vmatpush1.msra.mxu0 0.0
      %1960 = vmatprep.subr.mxu0 0.0
      %1961 = vmatpush1.msra.mxu0 0.0
      %1962 = vmatprep.subr.mxu0 0.0
      %1963 = vmatpush1.msra.mxu0 0.0
      %1964 = vmatprep.subr.mxu0 0.0
      %1965 = vmatpush1.msra.mxu0 0.0
      %1966 = vmatprep.subr.mxu0 0.0
      %1967 = vmatpush1.msra.mxu0 0.0
      %1968 = vmatprep.subr.mxu0 0.0
      %1969 = vmatpush1.msra.mxu0 0.0
      %1970 = vmatprep.subr.mxu0 %v1934
      %1971 = vmatpush1.msra.mxu0 %v1931
      %1972 = vmatprep.subr.mxu0 %v1919
      %1973 = vmatpush1.msra.mxu0 %v1918
      %1974 = vmatprep.subr.mxu0 %v1913
      %1975 = vmatpush1.msra.mxu0 %v1912
      %1976 = vmatprep.subr.mxu0 %v1907
      %1977 = vmatpush1.msra.mxu0 %v1906
      %1978 = vmatprep.subr.mxu0 %v1901
      %1979 = vmatpush1.msra.mxu0 %v1900
      %1980 = vmatprep.subr.mxu0 0.0
      %1981 = vmatpush2.msra.mxu0 0.0
      %1982 = vmatprep.subr.mxu0 0.0
      %1983 = vmatpush2.msra.mxu0 0.0
      %1984 = vmatprep.subr.mxu0 0.0
      %1985 = vmatpush2.msra.mxu0 0.0
      %1986 = vmatprep.subr.mxu0 0.0
      %1987 = vmatpush2.msra.mxu0 0.0
      %1988 = vmatprep.subr.mxu0 0.0
      %1989 = vmatpush2.msra.mxu0 0.0
      %1990 = vmatprep.subr.mxu0 0.0
      %1991 = vmatpush2.msra.mxu0 0.0
      %1992 = vmatprep.subr.mxu0 0.0
      %1993 = vmatpush2.msra.mxu0 0.0
      %1994 = vmatprep.subr.mxu0 0.0
      %1995 = vmatpush2.msra.mxu0 0.0
      %1996 = vmatprep.subr.mxu0 0.0
      %1997 = vmatpush2.msra.mxu0 0.0
      %1998 = vmatprep.subr.mxu0 0.0
      %1999 = vmatpush2.msra.mxu0 0.0
      %2000 = vmatprep.subr.mxu0 0.0
      %2001 = vmatpush2.msra.mxu0 0.0
      %2002 = vmatprep.subr.mxu0 0.0
      %2003 = vmatpush2.msra.mxu0 0.0
      %2004 = vmatprep.subr.mxu0 0.0
      %2005 = vmatpush2.msra.mxu0 0.0
      %2006 = vmatprep.subr.mxu0 0.0
      %2007 = vmatpush2.msra.mxu0 0.0
      %2008 = vmatprep.subr.mxu0 0.0
      %2009 = vmatpush2.msra.mxu0 0.0
      %2010 = vmatprep.subr.mxu0 0.0
      %2011 = vmatpush2.msra.mxu0 0.0
      %2012 = vmatprep.mubr.f32.mxu0 0.0
      %2013 = vmatmul.mubr.f32.gmra.mxu0 %v812
      %v2014 = vpop.f32.mrf.mxu0
      %v2015 = vadd.f32 0.0, %v2014
      %v2016 = vpop.f32.mrf.mxu0
      %v2017 = vadd.f32 0.0, %v2016
      %2018 = vmatprep.mubr.f32.mxu0 0.0
      %2019 = vmatmul.mubr.f32.gmra.mxu0 %v815
      %v2020 = vpop.f32.mrf.mxu0
      %v2021 = vadd.f32 0.0, %v2020
      %v2022 = vpop.f32.mrf.mxu0
      %v2023 = vadd.f32 0.0, %v2022
      %2024 = vdwg.mxu0
      %2025 = vmatprep.subr.mxu0 0.0
      %2026 = vmatpush1.msra.mxu0 0.0
      %2027 = vmatprep.subr.mxu0 0.0
      %2028 = vmatpush1.msra.mxu0 0.0
      %2029 = vmatprep.subr.mxu0 0.0
      %2030 = vmatpush1.msra.mxu0 0.0
      %2031 = vmatprep.subr.mxu0 0.0
      %2032 = vmatpush1.msra.mxu0 0.0
      %2033 = vmatprep.subr.mxu0 0.0
      %2034 = vmatpush1.msra.mxu0 0.0
      %2035 = vmatprep.subr.mxu0 0.0
      %2036 = vmatpush1.msra.mxu0 0.0
      %2037 = vmatprep.subr.mxu0 0.0
      %2038 = vmatpush1.msra.mxu0 0.0
      %2039 = vmatprep.subr.mxu0 0.0
      %2040 = vmatpush1.msra.mxu0 0.0
      %2041 = vmatprep.subr.mxu0 0.0
      %2042 = vmatpush1.msra.mxu0 0.0
      %2043 = vmatprep.subr.mxu0 0.0
      %2044 = vmatpush1.msra.mxu0 0.0
      %2045 = vmatprep.subr.mxu0 0.0
      %2046 = vmatpush1.msra.mxu0 0.0
      %2047 = vmatprep.subr.mxu0 %v1940
      %2048 = vmatpush1.msra.mxu0 %v1937
      %2049 = vmatprep.subr.mxu0 %v1921
      %2050 = vmatpush1.msra.mxu0 %v1920
      %2051 = vmatprep.subr.mxu0 %v1915
      %2052 = vmatpush1.msra.mxu0 %v1914
      %2053 = vmatprep.subr.mxu0 %v1909
      %2054 = vmatpush1.msra.mxu0 %v1908
      %2055 = vmatprep.subr.mxu0 %v1903
      %2056 = vmatpush1.msra.mxu0 %v1902
      %2057 = vmatprep.subr.mxu0 0.0
      %2058 = vmatpush2.msra.mxu0 0.0
      %2059 = vmatprep.subr.mxu0 0.0
      %2060 = vmatpush2.msra.mxu0 0.0
      %2061 = vmatprep.subr.mxu0 0.0
      %2062 = vmatpush2.msra.mxu0 0.0
      %2063 = vmatprep.subr.mxu0 0.0
      %2064 = vmatpush2.msra.mxu0 0.0
      %2065 = vmatprep.subr.mxu0 0.0
      %2066 = vmatpush2.msra.mxu0 0.0
      %2067 = vmatprep.subr.mxu0 0.0
      %2068 = vmatpush2.msra.mxu0 0.0
      %2069 = vmatprep.subr.mxu0 0.0
      %2070 = vmatpush2.msra.mxu0 0.0
      %2071 = vmatprep.subr.mxu0 0.0
      %2072 = vmatpush2.msra.mxu0 0.0
      %2073 = vmatprep.subr.mxu0 0.0
      %2074 = vmatpush2.msra.mxu0 0.0
      %2075 = vmatprep.subr.mxu0 0.0
      %2076 = vmatpush2.msra.mxu0 0.0
      %2077 = vmatprep.subr.mxu0 0.0
      %2078 = vmatpush2.msra.mxu0 0.0
      %2079 = vmatprep.subr.mxu0 0.0
      %2080 = vmatpush2.msra.mxu0 0.0
      %2081 = vmatprep.subr.mxu0 0.0
      %2082 = vmatpush2.msra.mxu0 0.0
      %2083 = vmatprep.subr.mxu0 0.0
      %2084 = vmatpush2.msra.mxu0 0.0
      %2085 = vmatprep.subr.mxu0 0.0
      %2086 = vmatpush2.msra.mxu0 0.0
      %2087 = vmatprep.subr.mxu0 0.0
      %2088 = vmatpush2.msra.mxu0 0.0
      %2089 = vmatprep.mubr.f32.mxu0 0.0
      %2090 = vmatmul.mubr.f32.gmra.mxu0 %v812
      %v2091 = vpop.f32.mrf.mxu0
      %v2092 = vadd.f32 0.0, %v2091
      %v2093 = vpop.f32.mrf.mxu0
      %v2094 = vadd.f32 0.0, %v2093
      %2095 = vmatprep.mubr.f32.mxu0 0.0
      %2096 = vmatmul.mubr.f32.gmra.mxu0 %v815
      %v2097 = vpop.f32.mrf.mxu0
      %v2098 = vadd.f32 0.0, %v2097
      %v2099 = vpop.f32.mrf.mxu0
      %v2100 = vadd.f32 0.0, %v2099
      %2101 = vdwg.mxu0
      %2102 = vmatprep.subr.mxu0 0.0
      %2103 = vmatpush1.msra.mxu0 0.0
      %2104 = vmatprep.subr.mxu0 0.0
      %2105 = vmatpush1.msra.mxu0 0.0
      %2106 = vmatprep.subr.mxu0 0.0
      %2107 = vmatpush1.msra.mxu0 0.0
      %2108 = vmatprep.subr.mxu0 0.0
      %2109 = vmatpush1.msra.mxu0 0.0
      %2110 = vmatprep.subr.mxu0 0.0
      %2111 = vmatpush1.msra.mxu0 0.0
      %2112 = vmatprep.subr.mxu0 0.0
      %2113 = vmatpush1.msra.mxu0 0.0
      %2114 = vmatprep.subr.mxu0 0.0
      %2115 = vmatpush1.msra.mxu0 0.0
      %2116 = vmatprep.subr.mxu0 0.0
      %2117 = vmatpush1.msra.mxu0 0.0
      %2118 = vmatprep.subr.mxu0 0.0
      %2119 = vmatpush1.msra.mxu0 0.0
      %2120 = vmatprep.subr.mxu0 0.0
      %2121 = vmatpush1.msra.mxu0 0.0
      %2122 = vmatprep.subr.mxu0 0.0
      %2123 = vmatpush1.msra.mxu0 0.0
      %2124 = vmatprep.subr.mxu0 %v1946
      %2125 = vmatpush1.msra.mxu0 %v1943
      %2126 = vmatprep.subr.mxu0 %v1923
      %2127 = vmatpush1.msra.mxu0 %v1922
      %2128 = vmatprep.subr.mxu0 %v1917
      %2129 = vmatpush1.msra.mxu0 %v1916
      %2130 = vmatprep.subr.mxu0 %v1911
      %2131 = vmatpush1.msra.mxu0 %v1910
      %2132 = vmatprep.subr.mxu0 %v1905
      %2133 = vmatpush1.msra.mxu0 %v1904
      %2134 = vmatprep.subr.mxu0 0.0
      %2135 = vmatpush2.msra.mxu0 0.0
      %2136 = vmatprep.subr.mxu0 0.0
      %2137 = vmatpush2.msra.mxu0 0.0
      %2138 = vmatprep.subr.mxu0 0.0
      %2139 = vmatpush2.msra.mxu0 0.0
      %2140 = vmatprep.subr.mxu0 0.0
      %2141 = vmatpush2.msra.mxu0 0.0
      %2142 = vmatprep.subr.mxu0 0.0
      %2143 = vmatpush2.msra.mxu0 0.0
      %2144 = vmatprep.subr.mxu0 0.0
      %2145 = vmatpush2.msra.mxu0 0.0
      %2146 = vmatprep.subr.mxu0 0.0
      %2147 = vmatpush2.msra.mxu0 0.0
      %2148 = vmatprep.subr.mxu0 0.0
      %2149 = vmatpush2.msra.mxu0 0.0
      %2150 = vmatprep.subr.mxu0 0.0
      %2151 = vmatpush2.msra.mxu0 0.0
      %2152 = vmatprep.subr.mxu0 0.0
      %2153 = vmatpush2.msra.mxu0 0.0
      %2154 = vmatprep.subr.mxu0 0.0
      %2155 = vmatpush2.msra.mxu0 0.0
      %2156 = vmatprep.subr.mxu0 0.0
      %2157 = vmatpush2.msra.mxu0 0.0
      %2158 = vmatprep.subr.mxu0 0.0
      %2159 = vmatpush2.msra.mxu0 0.0
      %2160 = vmatprep.subr.mxu0 0.0
      %2161 = vmatpush2.msra.mxu0 0.0
      %2162 = vmatprep.subr.mxu0 0.0
      %2163 = vmatpush2.msra.mxu0 0.0
      %2164 = vmatprep.subr.mxu0 0.0
      %2165 = vmatpush2.msra.mxu0 0.0
      %2166 = vmatprep.mubr.f32.mxu0 0.0
      %2167 = vmatmul.mubr.f32.gmra.mxu0 %v812
      %v2168 = vpop.f32.mrf.mxu0
      %v2169 = vadd.f32 0.0, %v2168
      %v2170 = vpop.f32.mrf.mxu0
      %v2171 = vadd.f32 0.0, %v2170
      %2172 = vmatprep.mubr.f32.mxu0 0.0
      %2173 = vmatmul.mubr.f32.gmra.mxu0 %v815
      %v2174 = vpop.f32.mrf.mxu0
      %v2175 = vadd.f32 0.0, %v2174
      %v2176 = vpop.f32.mrf.mxu0
      %v2177 = vadd.f32 0.0, %v2176
      %2178 = vdwg.mxu0
      %v2179 = vadd.f32 %v2015, %v1147
      %v2180 = vadd.f32 %v2017, %v1147
      %v2181 = vadd.f32 %v2092, %v1147
      %v2182 = vadd.f32 %v2094, %v1147
      %v2183 = vadd.f32 %v2169, %v1147
      %v2184 = vadd.f32 %v2171, %v1147
      %vm2185 = vcmp.ge.f32.partialorder %v2179, 0.0
      %vm2186 = vcmp.ge.f32.partialorder %v2180, 0.0
      %vm2187 = vcmp.ge.f32.partialorder %v2181, 0.0
      %vm2188 = vcmp.ge.f32.partialorder %v2182, 0.0
      %vm2189 = vcmp.ge.f32.partialorder %v2183, 0.0
      %vm2190 = vcmp.ge.f32.partialorder %v2184, 0.0
      %v2191 = vmul.f32 %v1166, %v2179
      %v2192 = vmul.f32 %v1166, %v2180
      %v2193 = vmul.f32 %v1166, %v2181
      %v2194 = vmul.f32 %v1166, %v2182
      %v2195 = vmul.f32 %v1166, %v2183
      %v2196 = vmul.f32 %v1166, %v2184
      %v2197 = vsel %vm2185, %v2179, %v2191
      %v2198 = vsel %vm2186, %v2180, %v2192
      %v2199 = vsel %vm2187, %v2181, %v2193
      %v2200 = vsel %vm2188, %v2182, %v2194
      %v2201 = vsel %vm2189, %v2183, %v2195
      %v2202 = vsel %vm2190, %v2184, %v2196
      %v2203 = vadd.f32 %v2021, %v1185
      %v2204 = vadd.f32 %v2023, %v1185
      %v2205 = vadd.f32 %v2098, %v1185
      %v2206 = vadd.f32 %v2100, %v1185
      %v2207 = vadd.f32 %v2175, %v1185
      %v2208 = vadd.f32 %v2177, %v1185
      %v2209 = vadd.f32 %v2197, %v2203
      %v2210 = vadd.f32 %v2198, %v2204
      %v2211 = vadd.f32 %v2199, %v2205
      %v2212 = vadd.f32 %v2200, %v2206
      %v2213 = vadd.f32 %v2201, %v2207
      %v2214 = vadd.f32 %v2202, %v2208
      %v2215 = vmax.f32 %v2209, 0.0
      %v2216 = vmax.f32 %v2210, 0.0
      %v2217 = vmax.f32 %v2211, 0.0
      %v2218 = vmax.f32 %v2212, 0.0
      %v2219 = vmax.f32 %v2213, 0.0
      %v2220 = vmax.f32 %v2214, 0.0
      %2221 = vst [vmem:[%s278] sm:$0xff] %v2215
      %2222 = vst [vmem:[%s278 + $0x8] sm:$0xff] %v2216
      %2223 = vst [vmem:[%s278 + $0x10] sm:$0xff] %v2217
      %2224 = vst [vmem:[%s278 + $0x18] sm:$0xff] %v2218
      %2225 = vst [vmem:[%s278 + $0x20] sm:$0xff] %v2219
      %2226 = vst [vmem:[%s278 + $0x28] sm:$0xff] %v2220
      %p2227 = scmp.lt.s32.totalorder %s18, 1
      %s2228 = scalar_select %p2227, %s18, 1
      %s2229 = smul.addr %s2228, 6
      %s2230 = smul.addr %s2229, 8
      %s2231 = scalar_lea.vmem %s7, %s2230
      // Predicated region
      $region49: #{rrconv_pallas.1} parent=47 // pred_check
        %p2232 = pneg %p188
      $region50: #{rrconv_pallas.1} parent=47 // pred_check_branch
        %2234 = sbr.rel (%p2232) target = $region52
      $region51: #{rrconv_pallas.1} parent=47 // pred_region
        _
      $region52: #{rrconv_pallas.1} parent=47 // pred_fallthru
        _
    $region48: #{rrconv_pallas.1} parent=5 // pred_fallthru
      _
    %p2235 = scmp.le.s32.totalorder 2, %s13
    // Predicated region
    $region53: #{rrconv_pallas.1} parent=5 // pred_check
      %p2236 = pneg %p2235
    $region54: #{rrconv_pallas.1} parent=5 // pred_check_branch
      %2238 = sbr.rel (%p2236) target = $region56
    $region55: #{rrconv_pallas.1} parent=5 // pred_region
      %s2239 = ssub.s32 %s13, 2
      // Predicated region
      $region57: #{rrconv_pallas.1} parent=55 // pred_check
        %p2240 = pneg %p194
      $region58: #{rrconv_pallas.1} parent=55 // pred_check_branch
        %2242 = sbr.rel (%p2240) target = $region60
      $region59: #{rrconv_pallas.1} parent=55 // pred_region
        %p2243 = scmp.lt.s32.totalorder %s19, 1
        %s2244 = scalar_select %p2243, %s19, 1
        %s2245 = smul.addr %s2244, 6
        %s2246 = smul.addr %s2245, 8
        %s2247 = scalar_lea.vmem %s7, %s2246
      $region60: #{rrconv_pallas.1} parent=55 // pred_fallthru
        _
    $region56: #{rrconv_pallas.1} parent=5 // pred_fallthru
      _
  $region6: #{rrconv_pallas.1} parent=0 // loop_footer
    %s17 = sadd.s32 1, %s13
  $region7: #{rrconv_pallas.1} parent=0 // loop_footer_branch
    %12 = sbr.rel target = $region3
  $region8: #{rrconv_pallas.1} parent=0 // loop_exit
    _

</llo_original>
